<compile_context>
chip_gen: v5e
topology: v5e:2x2
jax: 0.10.0
libtpu: 0.0.40
codegen_flags: <defaults>
</compile_context>

<pallas_src>
import functools
import math

import jax
import jax.numpy as jnp
from jax.experimental import pallas as pl
from jax.experimental.pallas import tpu as pltpu


# ----------------------------- helpers ---------------------------------------
def _layernorm(x, gamma, beta, eps):
    mu = jnp.mean(x, axis=-1, keepdims=True)
    var = jnp.mean((x - mu) ** 2, axis=-1, keepdims=True)
    return (x - mu) * jax.lax.rsqrt(var + eps) * gamma + beta


# --------------------------- fused encoder kernel -----------------------------
def fused_encoder_kernel(x_ref, cos_ref, sin_ref, keep_ref,
                         wqkv_ref, bqkv_ref, wo_ref, bo_ref, g1_ref, be1_ref,
                         w1_ref, b1_ref, w2_ref, b2_ref, g2_ref, be2_ref,
                         o_ref, *, num_heads, num_layers, eps):
    D = x_ref.shape[-1]
    half = D // 2
    dh = D // num_heads
    scale = 1.0 / math.sqrt(dh)

    # ---- RoPE (GPT-NeoX half-split) as pure register values ------------------
    xe = x_ref[0]                                      # (S, D) f32
    cos = cos_ref[...]                                 # (S, D/2)
    sin = sin_ref[...]                                 # (S, D/2)
    x_lo = xe[:, :half]
    x_hi = xe[:, half:]
    x = jnp.concatenate([x_lo * cos - x_hi * sin,
                         x_hi * cos + x_lo * sin], axis=-1)   # (S, D)

    keep = keep_ref[0] > 0.5                           # (1, S) key-keep mask

    # ---- transformer layers (statically unrolled; fine at small L) -----------
    for l in range(num_layers):
        # fused QKV projection: one lane-dense (S, D) @ (D, 3D) bf16 matmul
        qkv = jnp.dot(x.astype(jnp.bfloat16), wqkv_ref[l],
                      preferred_element_type=jnp.float32) + bqkv_ref[l]  # (S, 3D)
        q = qkv[:, 0 * D:1 * D]
        k = qkv[:, 1 * D:2 * D]
        v = qkv[:, 2 * D:3 * D]

        # per-head attention core (head slices live on the lane axis; dh is
        # tiny so the score / context matmuls are per-head regardless)
        ctx_parts = []
        for h in range(num_heads):
            sl = slice(h * dh, (h + 1) * dh)
            qh = q[:, sl]                               # (S, dh)
            kh = k[:, sl]
            vh = v[:, sl]
            s = jax.lax.dot_general(
                qh, kh, (((1,), (1,)), ((), ())),
                preferred_element_type=jnp.float32) * scale        # (S, S)
            s = jnp.where(keep, s, -1e9)                # mask padded keys
            s = s - jnp.max(s, axis=-1, keepdims=True)
            p = jnp.exp(s)
            p = p / jnp.sum(p, axis=-1, keepdims=True)  # exact softmax
            ctx_parts.append(jnp.dot(p, vh, preferred_element_type=jnp.float32))
        ctx = jnp.concatenate(ctx_parts, axis=-1)       # (S, D)

        # single full-width output projection against the unsplit Wo
        y = jnp.dot(ctx.astype(jnp.bfloat16), wo_ref[l],
                    preferred_element_type=jnp.float32) + bo_ref[l]

        # residual + layernorm1 (f32)
        x = _layernorm(y + x, g1_ref[l], be1_ref[l], eps)

        # feed-forward: Linear -> ReLU -> Linear (bf16 operands, f32 accumulate)
        h1 = jnp.maximum(
            jnp.dot(x.astype(jnp.bfloat16), w1_ref[l],
                    preferred_element_type=jnp.float32) + b1_ref[l], 0.0)
        y2 = jnp.dot(h1.astype(jnp.bfloat16), w2_ref[l],
                     preferred_element_type=jnp.float32) + b2_ref[l]

        # residual + layernorm2 (f32)
        x = _layernorm(x + y2, g2_ref[l], be2_ref[l], eps)

    o_ref[0] = x


# ----------------------------- parameter prep ---------------------------------
def init_encoder_params(key, n_blocks, vocab_size, D, pad_idx):
    key, k_emb = jax.random.split(key)
    emb = jax.random.normal(k_emb, (vocab_size, D), jnp.float32) * 0.02
    emb = emb.at[pad_idx].set(0.0)                      # padding_idx row is zero

    blocks = []
    for _ in range(n_blocks):
        key, *ks = jax.random.split(key, 7)
        w = lambda k: jax.random.normal(k, (D, D), jnp.float32) * 0.02
        zb = jnp.zeros((1, D), jnp.float32)
        blocks.append({
            "wq": w(ks[0]), "bq": zb, "wk": w(ks[1]), "bk": zb,
            "wv": w(ks[2]), "bv": zb, "wo": w(ks[3]), "bo": zb,
            "g1": jnp.ones((1, D), jnp.float32), "be1": zb,
            "w1": w(ks[4]), "b1": zb, "w2": w(ks[5]), "b2": zb,
            "g2": jnp.ones((1, D), jnp.float32), "be2": zb,
        })
    return emb, blocks


def pack_block_params(blocks):
    """Stack per-layer params; fuse Wq|Wk|Wv -> (D,3D); bf16 matmul weights."""
    bf16 = jnp.bfloat16

    wqkv = jnp.stack([jnp.concatenate([b["wq"], b["wk"], b["wv"]], axis=1)
                      for b in blocks]).astype(bf16)                  # (L, D, 3D)
    bqkv = jnp.stack([jnp.concatenate([b["bq"], b["bk"], b["bv"]], axis=1)
                      for b in blocks])                               # (L, 1, 3D)
    wo = jnp.stack([b["wo"] for b in blocks]).astype(bf16)            # (L, D, D)
    bo = jnp.stack([b["bo"] for b in blocks])                         # (L, 1, D)
    g1 = jnp.stack([b["g1"] for b in blocks])
    be1 = jnp.stack([b["be1"] for b in blocks])
    w1 = jnp.stack([b["w1"] for b in blocks]).astype(bf16)
    b1 = jnp.stack([b["b1"] for b in blocks])
    w2 = jnp.stack([b["w2"] for b in blocks]).astype(bf16)
    b2 = jnp.stack([b["b2"] for b in blocks])
    g2 = jnp.stack([b["g2"] for b in blocks])
    be2 = jnp.stack([b["be2"] for b in blocks])
    return [wqkv, bqkv, wo, bo, g1, be1, w1, b1, w2, b2, g2, be2]


def rope_tables(S, D):
    half = D // 2
    inv_freq = 1.0 / (10000.0 ** (jnp.arange(half, dtype=jnp.float32) * 2.0 / D))
    pos = jnp.arange(S, dtype=jnp.float32)
    ang = pos[:, None] * inv_freq[None, :]              # (S, D//2)
    return jnp.cos(ang), jnp.sin(ang)


# --------------------------------- Encoder -------------------------------------
def encoder_forward(ids, mask, emb_table, packed, *, batch, seq, dim,
                    num_heads, num_layers, eps):
    # Embedding lookup (data-dependent gather) kept as JAX glue.
    x = emb_table[ids]                                  # (B, S, D)
    cos, sin = rope_tables(seq, dim)                    # (S, D/2) each (no tile)
    keep = mask.astype(jnp.float32).reshape(batch, 1, seq)   # (B, 1, S)

    kernel = functools.partial(fused_encoder_kernel, num_heads=num_heads,
                               num_layers=num_layers, eps=eps)

    def const_spec(shape):
        nd = len(shape)
        return pl.BlockSpec(shape, lambda b, _z=(0,) * nd: _z)

    in_specs = [
        pl.BlockSpec((1, seq, dim), lambda b: (b, 0, 0)),        # x (per batch)
        const_spec((seq, dim // 2)),                             # cos
        const_spec((seq, dim // 2)),                             # sin
        pl.BlockSpec((1, 1, seq), lambda b: (b, 0, 0)),          # key-keep mask
    ] + [const_spec(tuple(p.shape)) for p in packed]             # stacked weights

    out = pl.pallas_call(
        kernel,
        grid=(batch,),
        in_specs=in_specs,
        out_specs=pl.BlockSpec((1, seq, dim), lambda b: (b, 0, 0)),
        out_shape=jax.ShapeDtypeStruct((batch, seq, dim), jnp.float32),
        compiler_params=pltpu.CompilerParams(
            dimension_semantics=("parallel",)),
    )(x, cos, sin, keep, *packed)
    return out


# ------------------------------ pure-JAX reference ------------------------------
def reference_forward(ids, mask, emb, blocks, num_heads, eps):
    x = emb[ids]                                        # (B, S, D)
    B, S, D = x.shape
    half = D // 2
    inv_freq = 1.0 / (10000.0 ** (jnp.arange(half, dtype=jnp.float32) * 2.0 / D))
    ang = jnp.arange(S, dtype=jnp.float32)[:, None] * inv_freq[None, :]
    cos, sin = jnp.cos(ang), jnp.sin(ang)
    x1, x2 = x[..., :half], x[..., half:]
    x = jnp.concatenate([x1 * cos - x2 * sin, x2 * cos + x1 * sin], axis=-1)

    dh = D // num_heads
    scale = 1.0 / math.sqrt(dh)
    keep = mask.astype(jnp.float32)[:, None, :]         # (B, 1, S)

    def ln(v, g, b):
        mu = v.mean(-1, keepdims=True)
        var = ((v - mu) ** 2).mean(-1, keepdims=True)
        return (v - mu) * jax.lax.rsqrt(var + eps) * g + b

    for p in blocks:
        q = x @ p["wq"] + p["bq"]
        k = x @ p["wk"] + p["bk"]
        v = x @ p["wv"] + p["bv"]
        outs = []
        for h in range(num_heads):
            qh = q[..., h * dh:(h + 1) * dh]
            kh = k[..., h * dh:(h + 1) * dh]
            vh = v[..., h * dh:(h + 1) * dh]
            s = jnp.einsum('bqd,bkd->bqk', qh, kh) * scale
            s = jnp.where(keep > 0.5, s, -1e9)
            pr = jax.nn.softmax(s, axis=-1)
            outs.append(jnp.einsum('bqk,bkd->bqd', pr, vh))
        attn = jnp.concatenate(outs, axis=-1)
        y = attn @ p["wo"] + p["bo"]
        x = ln(y + x, p["g1"], p["be1"])
        hdd = jnp.maximum(x @ p["w1"] + p["b1"], 0.0)
        y2 = hdd @ p["w2"] + p["b2"]
        x = ln(x + y2, p["g2"], p["be2"])
    return x


# ----------------------------------- main ---------------------------------------
if __name__ == "__main__":
    B, S, D = 2, 8, 32
    HEADS = 4
    VOCAB = 50
    PAD_IDX = 0
    N_BLOCKS = 2
    EPS = 1e-5

    key = jax.random.PRNGKey(0)
    key, k_ids = jax.random.split(key)
    ids = jax.random.randint(k_ids, (B, S), 1, VOCAB)
    # make the last two tokens of the second sequence padding
    ids = ids.at[1, -2:].set(PAD_IDX)
    mask = (ids != PAD_IDX).astype(jnp.int32)           # (B, S), 1 = valid token

    emb_table, blocks = init_encoder_params(key, N_BLOCKS, VOCAB, D, PAD_IDX)
    packed = pack_block_params(blocks)

    out = encoder_forward(ids, mask, emb_table, packed,
                          batch=B, seq=S, dim=D, num_heads=HEADS,
                          num_layers=N_BLOCKS, eps=EPS)
    jax.block_until_ready(out)
    assert out.shape == (B, S, D)
    assert bool(jnp.all(jnp.isfinite(out)))

    ref = reference_forward(ids, mask, emb_table, blocks, HEADS, EPS)
    max_err = float(jnp.max(jnp.abs(out - ref)))
    assert max_err < 5e-2, f"kernel/reference mismatch, max abs err = {max_err}"

    print("KERNEL_OK")
</pallas_src>

<mosaic_0001>
module attributes {stable_mosaic.version = 11 : i64} {
  func.func @fused_encoder_kernel(%arg0: i32, %arg1: memref<1x8x32xf32, #tpu.memory_space<vmem>>, %arg2: memref<8x16xf32, #tpu.memory_space<vmem>>, %arg3: memref<8x16xf32, #tpu.memory_space<vmem>>, %arg4: memref<1x1x8xf32, #tpu.memory_space<vmem>>, %arg5: memref<2x32x96xbf16, #tpu.memory_space<vmem>>, %arg6: memref<2x1x96xf32, #tpu.memory_space<vmem>>, %arg7: memref<2x32x32xbf16, #tpu.memory_space<vmem>>, %arg8: memref<2x1x32xf32, #tpu.memory_space<vmem>>, %arg9: memref<2x1x32xf32, #tpu.memory_space<vmem>>, %arg10: memref<2x1x32xf32, #tpu.memory_space<vmem>>, %arg11: memref<2x32x32xbf16, #tpu.memory_space<vmem>>, %arg12: memref<2x1x32xf32, #tpu.memory_space<vmem>>, %arg13: memref<2x32x32xbf16, #tpu.memory_space<vmem>>, %arg14: memref<2x1x32xf32, #tpu.memory_space<vmem>>, %arg15: memref<2x1x32xf32, #tpu.memory_space<vmem>>, %arg16: memref<2x1x32xf32, #tpu.memory_space<vmem>>, %arg17: memref<1x8x32xf32, #tpu.memory_space<vmem>>) attributes {dimension_semantics = [#tpu.dimension_semantics<parallel>], iteration_bounds = array<i64: 2>, scalar_prefetch = 0 : i64, scratch_operands = 0 : i64, tpu.core_type = #tpu.core_type<tc>, window_params = [{transform_indices = @transform_0, window_bounds = array<i64: 1, 8, 32>}, {pipeline_mode = #tpu.pipeline_mode<synchronous>, transform_indices = @transform_1, window_bounds = array<i64: 8, 16>}, {pipeline_mode = #tpu.pipeline_mode<synchronous>, transform_indices = @transform_2, window_bounds = array<i64: 8, 16>}, {transform_indices = @transform_3, window_bounds = array<i64: 1, 1, 8>}, {pipeline_mode = #tpu.pipeline_mode<synchronous>, transform_indices = @transform_4, window_bounds = array<i64: 2, 32, 96>}, {pipeline_mode = #tpu.pipeline_mode<synchronous>, transform_indices = @transform_5, window_bounds = array<i64: 2, 1, 96>}, {pipeline_mode = #tpu.pipeline_mode<synchronous>, transform_indices = @transform_6, window_bounds = array<i64: 2, 32, 32>}, {pipeline_mode = #tpu.pipeline_mode<synchronous>, transform_indices = @transform_7, window_bounds = array<i64: 2, 1, 32>}, {pipeline_mode = #tpu.pipeline_mode<synchronous>, transform_indices = @transform_8, window_bounds = array<i64: 2, 1, 32>}, {pipeline_mode = #tpu.pipeline_mode<synchronous>, transform_indices = @transform_9, window_bounds = array<i64: 2, 1, 32>}, {pipeline_mode = #tpu.pipeline_mode<synchronous>, transform_indices = @transform_10, window_bounds = array<i64: 2, 32, 32>}, {pipeline_mode = #tpu.pipeline_mode<synchronous>, transform_indices = @transform_11, window_bounds = array<i64: 2, 1, 32>}, {pipeline_mode = #tpu.pipeline_mode<synchronous>, transform_indices = @transform_12, window_bounds = array<i64: 2, 32, 32>}, {pipeline_mode = #tpu.pipeline_mode<synchronous>, transform_indices = @transform_13, window_bounds = array<i64: 2, 1, 32>}, {pipeline_mode = #tpu.pipeline_mode<synchronous>, transform_indices = @transform_14, window_bounds = array<i64: 2, 1, 32>}, {pipeline_mode = #tpu.pipeline_mode<synchronous>, transform_indices = @transform_15, window_bounds = array<i64: 2, 1, 32>}, {transform_indices = @transform_16, window_bounds = array<i64: 1, 8, 32>}]} {
    %c0 = arith.constant 0 : index
    %c0_0 = arith.constant 0 : index
    %c0_1 = arith.constant 0 : index
    %0 = vector.load %arg1[%c0, %c0_0, %c0_1] : memref<1x8x32xf32, #tpu.memory_space<vmem>>, vector<1x8x32xf32>
    %1 = vector.shape_cast %0 : vector<1x8x32xf32> to vector<8x32xf32>
    %c0_2 = arith.constant 0 : index
    %c0_3 = arith.constant 0 : index
    %2 = vector.load %arg2[%c0_2, %c0_3] : memref<8x16xf32, #tpu.memory_space<vmem>>, vector<8x16xf32>
    %c0_4 = arith.constant 0 : index
    %c0_5 = arith.constant 0 : index
    %3 = vector.load %arg3[%c0_4, %c0_5] : memref<8x16xf32, #tpu.memory_space<vmem>>, vector<8x16xf32>
    %4 = vector.extract_strided_slice %1 {offsets = [0, 0], sizes = [8, 16], strides = [1, 1]} : vector<8x32xf32> to vector<8x16xf32>
    %5 = vector.extract_strided_slice %1 {offsets = [0, 16], sizes = [8, 16], strides = [1, 1]} : vector<8x32xf32> to vector<8x16xf32>
    %6 = arith.mulf %4, %2 : vector<8x16xf32>
    %7 = arith.mulf %5, %3 : vector<8x16xf32>
    %8 = arith.subf %6, %7 : vector<8x16xf32>
    %9 = arith.mulf %5, %2 : vector<8x16xf32>
    %10 = arith.mulf %4, %3 : vector<8x16xf32>
    %11 = arith.addf %9, %10 : vector<8x16xf32>
    %12 = tpu.concatenate %8, %11 in 1 : vector<8x16xf32>, vector<8x16xf32> -> vector<8x32xf32>
    %c0_6 = arith.constant 0 : index
    %c0_7 = arith.constant 0 : index
    %c0_8 = arith.constant 0 : index
    %13 = vector.load %arg4[%c0_6, %c0_7, %c0_8] : memref<1x1x8xf32, #tpu.memory_space<vmem>>, vector<1x1x8xf32>
    %14 = vector.shape_cast %13 : vector<1x1x8xf32> to vector<1x8xf32>
    %cst = arith.constant 5.000000e-01 : f32
    %15 = vector.broadcast %cst : f32 to vector<1x8xf32>
    %16 = arith.cmpf ogt, %14, %15 : vector<1x8xf32>
    %17 = arith.truncf %12 : vector<8x32xf32> to vector<8x32xbf16>
    %c0_9 = arith.constant 0 : index
    %c0_10 = arith.constant 0 : index
    %c0_11 = arith.constant 0 : index
    %18 = vector.load %arg5[%c0_9, %c0_10, %c0_11] : memref<2x32x96xbf16, #tpu.memory_space<vmem>>, vector<1x32x96xbf16>
    %19 = vector.shape_cast %18 : vector<1x32x96xbf16> to vector<32x96xbf16>
    %cst_12 = arith.constant dense<0.000000e+00> : vector<8x96xf32>
    %20 = tpu.matmul %17, %19, %cst_12 {dimension_numbers = #tpu.dot_dimension_numbers<[1], [0], [0], [1], [0, 0, 1, 1], [], []>} : vector<8x32xbf16>, vector<32x96xbf16>, vector<8x96xf32> -> vector<8x96xf32>
    %c0_13 = arith.constant 0 : index
    %c0_14 = arith.constant 0 : index
    %c0_15 = arith.constant 0 : index
    %21 = vector.load %arg6[%c0_13, %c0_14, %c0_15] : memref<2x1x96xf32, #tpu.memory_space<vmem>>, vector<1x1x96xf32>
    %22 = vector.shape_cast %21 : vector<1x1x96xf32> to vector<1x96xf32>
    %23 = vector.broadcast %22 : vector<1x96xf32> to vector<8x96xf32>
    %24 = arith.addf %20, %23 : vector<8x96xf32>
    %25 = vector.extract_strided_slice %24 {offsets = [0, 0], sizes = [8, 32], strides = [1, 1]} : vector<8x96xf32> to vector<8x32xf32>
    %26 = vector.extract_strided_slice %24 {offsets = [0, 32], sizes = [8, 32], strides = [1, 1]} : vector<8x96xf32> to vector<8x32xf32>
    %27 = vector.extract_strided_slice %24 {offsets = [0, 64], sizes = [8, 32], strides = [1, 1]} : vector<8x96xf32> to vector<8x32xf32>
    %28 = vector.extract_strided_slice %25 {offsets = [0, 0], sizes = [8, 8], strides = [1, 1]} : vector<8x32xf32> to vector<8x8xf32>
    %29 = vector.extract_strided_slice %26 {offsets = [0, 0], sizes = [8, 8], strides = [1, 1]} : vector<8x32xf32> to vector<8x8xf32>
    %30 = vector.extract_strided_slice %27 {offsets = [0, 0], sizes = [8, 8], strides = [1, 1]} : vector<8x32xf32> to vector<8x8xf32>
    %cst_16 = arith.constant dense<0.000000e+00> : vector<8x8xf32>
    %31 = tpu.matmul %28, %29, %cst_16 {dimension_numbers = #tpu.dot_dimension_numbers<[1], [1], [0], [0], [0, 0, 1, 0], [], []>} : vector<8x8xf32>, vector<8x8xf32>, vector<8x8xf32> -> vector<8x8xf32>
    %cst_17 = arith.constant 0.353553385 : f32
    %32 = vector.broadcast %cst_17 : f32 to vector<8x8xf32>
    %33 = arith.mulf %31, %32 : vector<8x8xf32>
    %cst_18 = arith.constant -1.000000e+09 : f32
    %34 = vector.shape_cast %16 : vector<1x8xi1> to vector<1x8xi1>
    %35 = vector.broadcast %34 : vector<1x8xi1> to vector<8x8xi1>
    %36 = vector.broadcast %cst_18 : f32 to vector<8x8xf32>
    %37 = arith.select %35, %33, %36 : vector<8x8xi1>, vector<8x8xf32>
    %cst_19 = arith.constant dense<0xFF800000> : vector<8xf32>
    %38 = vector.multi_reduction <maximumf>, %37, %cst_19 [1] : vector<8x8xf32> to vector<8xf32>
    %39 = vector.shape_cast %38 : vector<8xf32> to vector<8x1xf32>
    %40 = vector.broadcast %39 : vector<8x1xf32> to vector<8x8xf32>
    %41 = arith.subf %37, %40 : vector<8x8xf32>
    %42 = math.exp %41 : vector<8x8xf32>
    %cst_20 = arith.constant dense<0.000000e+00> : vector<8xf32>
    %43 = vector.multi_reduction <add>, %42, %cst_20 [1] : vector<8x8xf32> to vector<8xf32>
    %44 = vector.shape_cast %43 : vector<8xf32> to vector<8x1xf32>
    %45 = vector.broadcast %44 : vector<8x1xf32> to vector<8x8xf32>
    %46 = arith.divf %42, %45 : vector<8x8xf32>
    %cst_21 = arith.constant dense<0.000000e+00> : vector<8x8xf32>
    %47 = tpu.matmul %46, %30, %cst_21 {dimension_numbers = #tpu.dot_dimension_numbers<[1], [0], [0], [1], [0, 0, 1, 1], [], []>} : vector<8x8xf32>, vector<8x8xf32>, vector<8x8xf32> -> vector<8x8xf32>
    %48 = vector.extract_strided_slice %25 {offsets = [0, 8], sizes = [8, 8], strides = [1, 1]} : vector<8x32xf32> to vector<8x8xf32>
    %49 = vector.extract_strided_slice %26 {offsets = [0, 8], sizes = [8, 8], strides = [1, 1]} : vector<8x32xf32> to vector<8x8xf32>
    %50 = vector.extract_strided_slice %27 {offsets = [0, 8], sizes = [8, 8], strides = [1, 1]} : vector<8x32xf32> to vector<8x8xf32>
    %cst_22 = arith.constant dense<0.000000e+00> : vector<8x8xf32>
    %51 = tpu.matmul %48, %49, %cst_22 {dimension_numbers = #tpu.dot_dimension_numbers<[1], [1], [0], [0], [0, 0, 1, 0], [], []>} : vector<8x8xf32>, vector<8x8xf32>, vector<8x8xf32> -> vector<8x8xf32>
    %cst_23 = arith.constant 0.353553385 : f32
    %52 = vector.broadcast %cst_23 : f32 to vector<8x8xf32>
    %53 = arith.mulf %51, %52 : vector<8x8xf32>
    %cst_24 = arith.constant -1.000000e+09 : f32
    %54 = vector.shape_cast %16 : vector<1x8xi1> to vector<1x8xi1>
    %55 = vector.broadcast %54 : vector<1x8xi1> to vector<8x8xi1>
    %56 = vector.broadcast %cst_24 : f32 to vector<8x8xf32>
    %57 = arith.select %55, %53, %56 : vector<8x8xi1>, vector<8x8xf32>
    %cst_25 = arith.constant dense<0xFF800000> : vector<8xf32>
    %58 = vector.multi_reduction <maximumf>, %57, %cst_25 [1] : vector<8x8xf32> to vector<8xf32>
    %59 = vector.shape_cast %58 : vector<8xf32> to vector<8x1xf32>
    %60 = vector.broadcast %59 : vector<8x1xf32> to vector<8x8xf32>
    %61 = arith.subf %57, %60 : vector<8x8xf32>
    %62 = math.exp %61 : vector<8x8xf32>
    %cst_26 = arith.constant dense<0.000000e+00> : vector<8xf32>
    %63 = vector.multi_reduction <add>, %62, %cst_26 [1] : vector<8x8xf32> to vector<8xf32>
    %64 = vector.shape_cast %63 : vector<8xf32> to vector<8x1xf32>
    %65 = vector.broadcast %64 : vector<8x1xf32> to vector<8x8xf32>
    %66 = arith.divf %62, %65 : vector<8x8xf32>
    %cst_27 = arith.constant dense<0.000000e+00> : vector<8x8xf32>
    %67 = tpu.matmul %66, %50, %cst_27 {dimension_numbers = #tpu.dot_dimension_numbers<[1], [0], [0], [1], [0, 0, 1, 1], [], []>} : vector<8x8xf32>, vector<8x8xf32>, vector<8x8xf32> -> vector<8x8xf32>
    %68 = vector.extract_strided_slice %25 {offsets = [0, 16], sizes = [8, 8], strides = [1, 1]} : vector<8x32xf32> to vector<8x8xf32>
    %69 = vector.extract_strided_slice %26 {offsets = [0, 16], sizes = [8, 8], strides = [1, 1]} : vector<8x32xf32> to vector<8x8xf32>
    %70 = vector.extract_strided_slice %27 {offsets = [0, 16], sizes = [8, 8], strides = [1, 1]} : vector<8x32xf32> to vector<8x8xf32>
    %cst_28 = arith.constant dense<0.000000e+00> : vector<8x8xf32>
    %71 = tpu.matmul %68, %69, %cst_28 {dimension_numbers = #tpu.dot_dimension_numbers<[1], [1], [0], [0], [0, 0, 1, 0], [], []>} : vector<8x8xf32>, vector<8x8xf32>, vector<8x8xf32> -> vector<8x8xf32>
    %cst_29 = arith.constant 0.353553385 : f32
    %72 = vector.broadcast %cst_29 : f32 to vector<8x8xf32>
    %73 = arith.mulf %71, %72 : vector<8x8xf32>
    %cst_30 = arith.constant -1.000000e+09 : f32
    %74 = vector.shape_cast %16 : vector<1x8xi1> to vector<1x8xi1>
    %75 = vector.broadcast %74 : vector<1x8xi1> to vector<8x8xi1>
    %76 = vector.broadcast %cst_30 : f32 to vector<8x8xf32>
    %77 = arith.select %75, %73, %76 : vector<8x8xi1>, vector<8x8xf32>
    %cst_31 = arith.constant dense<0xFF800000> : vector<8xf32>
    %78 = vector.multi_reduction <maximumf>, %77, %cst_31 [1] : vector<8x8xf32> to vector<8xf32>
    %79 = vector.shape_cast %78 : vector<8xf32> to vector<8x1xf32>
    %80 = vector.broadcast %79 : vector<8x1xf32> to vector<8x8xf32>
    %81 = arith.subf %77, %80 : vector<8x8xf32>
    %82 = math.exp %81 : vector<8x8xf32>
    %cst_32 = arith.constant dense<0.000000e+00> : vector<8xf32>
    %83 = vector.multi_reduction <add>, %82, %cst_32 [1] : vector<8x8xf32> to vector<8xf32>
    %84 = vector.shape_cast %83 : vector<8xf32> to vector<8x1xf32>
    %85 = vector.broadcast %84 : vector<8x1xf32> to vector<8x8xf32>
    %86 = arith.divf %82, %85 : vector<8x8xf32>
    %cst_33 = arith.constant dense<0.000000e+00> : vector<8x8xf32>
    %87 = tpu.matmul %86, %70, %cst_33 {dimension_numbers = #tpu.dot_dimension_numbers<[1], [0], [0], [1], [0, 0, 1, 1], [], []>} : vector<8x8xf32>, vector<8x8xf32>, vector<8x8xf32> -> vector<8x8xf32>
    %88 = vector.extract_strided_slice %25 {offsets = [0, 24], sizes = [8, 8], strides = [1, 1]} : vector<8x32xf32> to vector<8x8xf32>
    %89 = vector.extract_strided_slice %26 {offsets = [0, 24], sizes = [8, 8], strides = [1, 1]} : vector<8x32xf32> to vector<8x8xf32>
    %90 = vector.extract_strided_slice %27 {offsets = [0, 24], sizes = [8, 8], strides = [1, 1]} : vector<8x32xf32> to vector<8x8xf32>
    %cst_34 = arith.constant dense<0.000000e+00> : vector<8x8xf32>
    %91 = tpu.matmul %88, %89, %cst_34 {dimension_numbers = #tpu.dot_dimension_numbers<[1], [1], [0], [0], [0, 0, 1, 0], [], []>} : vector<8x8xf32>, vector<8x8xf32>, vector<8x8xf32> -> vector<8x8xf32>
    %cst_35 = arith.constant 0.353553385 : f32
    %92 = vector.broadcast %cst_35 : f32 to vector<8x8xf32>
    %93 = arith.mulf %91, %92 : vector<8x8xf32>
    %cst_36 = arith.constant -1.000000e+09 : f32
    %94 = vector.shape_cast %16 : vector<1x8xi1> to vector<1x8xi1>
    %95 = vector.broadcast %94 : vector<1x8xi1> to vector<8x8xi1>
    %96 = vector.broadcast %cst_36 : f32 to vector<8x8xf32>
    %97 = arith.select %95, %93, %96 : vector<8x8xi1>, vector<8x8xf32>
    %cst_37 = arith.constant dense<0xFF800000> : vector<8xf32>
    %98 = vector.multi_reduction <maximumf>, %97, %cst_37 [1] : vector<8x8xf32> to vector<8xf32>
    %99 = vector.shape_cast %98 : vector<8xf32> to vector<8x1xf32>
    %100 = vector.broadcast %99 : vector<8x1xf32> to vector<8x8xf32>
    %101 = arith.subf %97, %100 : vector<8x8xf32>
    %102 = math.exp %101 : vector<8x8xf32>
    %cst_38 = arith.constant dense<0.000000e+00> : vector<8xf32>
    %103 = vector.multi_reduction <add>, %102, %cst_38 [1] : vector<8x8xf32> to vector<8xf32>
    %104 = vector.shape_cast %103 : vector<8xf32> to vector<8x1xf32>
    %105 = vector.broadcast %104 : vector<8x1xf32> to vector<8x8xf32>
    %106 = arith.divf %102, %105 : vector<8x8xf32>
    %cst_39 = arith.constant dense<0.000000e+00> : vector<8x8xf32>
    %107 = tpu.matmul %106, %90, %cst_39 {dimension_numbers = #tpu.dot_dimension_numbers<[1], [0], [0], [1], [0, 0, 1, 1], [], []>} : vector<8x8xf32>, vector<8x8xf32>, vector<8x8xf32> -> vector<8x8xf32>
    %108 = tpu.concatenate %47, %67, %87, %107 in 1 : vector<8x8xf32>, vector<8x8xf32>, vector<8x8xf32>, vector<8x8xf32> -> vector<8x32xf32>
    %109 = arith.truncf %108 : vector<8x32xf32> to vector<8x32xbf16>
    %c0_40 = arith.constant 0 : index
    %c0_41 = arith.constant 0 : index
    %c0_42 = arith.constant 0 : index
    %110 = vector.load %arg7[%c0_40, %c0_41, %c0_42] : memref<2x32x32xbf16, #tpu.memory_space<vmem>>, vector<1x32x32xbf16>
    %111 = vector.shape_cast %110 : vector<1x32x32xbf16> to vector<32x32xbf16>
    %cst_43 = arith.constant dense<0.000000e+00> : vector<8x32xf32>
    %112 = tpu.matmul %109, %111, %cst_43 {dimension_numbers = #tpu.dot_dimension_numbers<[1], [0], [0], [1], [0, 0, 1, 1], [], []>} : vector<8x32xbf16>, vector<32x32xbf16>, vector<8x32xf32> -> vector<8x32xf32>
    %c0_44 = arith.constant 0 : index
    %c0_45 = arith.constant 0 : index
    %c0_46 = arith.constant 0 : index
    %113 = vector.load %arg8[%c0_44, %c0_45, %c0_46] : memref<2x1x32xf32, #tpu.memory_space<vmem>>, vector<1x1x32xf32>
    %114 = vector.shape_cast %113 : vector<1x1x32xf32> to vector<1x32xf32>
    %115 = vector.broadcast %114 : vector<1x32xf32> to vector<8x32xf32>
    %116 = arith.addf %112, %115 : vector<8x32xf32>
    %117 = arith.addf %116, %12 : vector<8x32xf32>
    %c0_47 = arith.constant 0 : index
    %c0_48 = arith.constant 0 : index
    %c0_49 = arith.constant 0 : index
    %118 = vector.load %arg9[%c0_47, %c0_48, %c0_49] : memref<2x1x32xf32, #tpu.memory_space<vmem>>, vector<1x1x32xf32>
    %119 = vector.shape_cast %118 : vector<1x1x32xf32> to vector<1x32xf32>
    %c0_50 = arith.constant 0 : index
    %c0_51 = arith.constant 0 : index
    %c0_52 = arith.constant 0 : index
    %120 = vector.load %arg10[%c0_50, %c0_51, %c0_52] : memref<2x1x32xf32, #tpu.memory_space<vmem>>, vector<1x1x32xf32>
    %121 = vector.shape_cast %120 : vector<1x1x32xf32> to vector<1x32xf32>
    %cst_53 = arith.constant dense<0.000000e+00> : vector<8xf32>
    %122 = vector.multi_reduction <add>, %117, %cst_53 [1] : vector<8x32xf32> to vector<8xf32>
    %123 = vector.shape_cast %122 : vector<8xf32> to vector<8x1xf32>
    %cst_54 = arith.constant 3.200000e+01 : f32
    %124 = vector.broadcast %cst_54 : f32 to vector<8x1xf32>
    %125 = arith.divf %123, %124 : vector<8x1xf32>
    %126 = vector.broadcast %125 : vector<8x1xf32> to vector<8x32xf32>
    %127 = arith.subf %117, %126 : vector<8x32xf32>
    %128 = arith.mulf %127, %127 : vector<8x32xf32>
    %cst_55 = arith.constant dense<0.000000e+00> : vector<8xf32>
    %129 = vector.multi_reduction <add>, %128, %cst_55 [1] : vector<8x32xf32> to vector<8xf32>
    %130 = vector.shape_cast %129 : vector<8xf32> to vector<8x1xf32>
    %cst_56 = arith.constant 3.200000e+01 : f32
    %131 = vector.broadcast %cst_56 : f32 to vector<8x1xf32>
    %132 = arith.divf %130, %131 : vector<8x1xf32>
    %133 = vector.broadcast %125 : vector<8x1xf32> to vector<8x32xf32>
    %134 = arith.subf %117, %133 : vector<8x32xf32>
    %cst_57 = arith.constant 9.99999974E-6 : f32
    %135 = vector.broadcast %cst_57 : f32 to vector<8x1xf32>
    %136 = arith.addf %132, %135 : vector<8x1xf32>
    %137 = math.rsqrt %136 : vector<8x1xf32>
    %138 = vector.broadcast %137 : vector<8x1xf32> to vector<8x32xf32>
    %139 = arith.mulf %134, %138 : vector<8x32xf32>
    %140 = vector.broadcast %119 : vector<1x32xf32> to vector<8x32xf32>
    %141 = arith.mulf %139, %140 : vector<8x32xf32>
    %142 = vector.broadcast %121 : vector<1x32xf32> to vector<8x32xf32>
    %143 = arith.addf %141, %142 : vector<8x32xf32>
    %144 = arith.truncf %143 : vector<8x32xf32> to vector<8x32xbf16>
    %c0_58 = arith.constant 0 : index
    %c0_59 = arith.constant 0 : index
    %c0_60 = arith.constant 0 : index
    %145 = vector.load %arg11[%c0_58, %c0_59, %c0_60] : memref<2x32x32xbf16, #tpu.memory_space<vmem>>, vector<1x32x32xbf16>
    %146 = vector.shape_cast %145 : vector<1x32x32xbf16> to vector<32x32xbf16>
    %cst_61 = arith.constant dense<0.000000e+00> : vector<8x32xf32>
    %147 = tpu.matmul %144, %146, %cst_61 {dimension_numbers = #tpu.dot_dimension_numbers<[1], [0], [0], [1], [0, 0, 1, 1], [], []>} : vector<8x32xbf16>, vector<32x32xbf16>, vector<8x32xf32> -> vector<8x32xf32>
    %c0_62 = arith.constant 0 : index
    %c0_63 = arith.constant 0 : index
    %c0_64 = arith.constant 0 : index
    %148 = vector.load %arg12[%c0_62, %c0_63, %c0_64] : memref<2x1x32xf32, #tpu.memory_space<vmem>>, vector<1x1x32xf32>
    %149 = vector.shape_cast %148 : vector<1x1x32xf32> to vector<1x32xf32>
    %150 = vector.broadcast %149 : vector<1x32xf32> to vector<8x32xf32>
    %151 = arith.addf %147, %150 : vector<8x32xf32>
    %cst_65 = arith.constant 0.000000e+00 : f32
    %152 = vector.broadcast %cst_65 : f32 to vector<8x32xf32>
    %153 = arith.maximumf %151, %152 : vector<8x32xf32>
    %154 = arith.truncf %153 : vector<8x32xf32> to vector<8x32xbf16>
    %c0_66 = arith.constant 0 : index
    %c0_67 = arith.constant 0 : index
    %c0_68 = arith.constant 0 : index
    %155 = vector.load %arg13[%c0_66, %c0_67, %c0_68] : memref<2x32x32xbf16, #tpu.memory_space<vmem>>, vector<1x32x32xbf16>
    %156 = vector.shape_cast %155 : vector<1x32x32xbf16> to vector<32x32xbf16>
    %cst_69 = arith.constant dense<0.000000e+00> : vector<8x32xf32>
    %157 = tpu.matmul %154, %156, %cst_69 {dimension_numbers = #tpu.dot_dimension_numbers<[1], [0], [0], [1], [0, 0, 1, 1], [], []>} : vector<8x32xbf16>, vector<32x32xbf16>, vector<8x32xf32> -> vector<8x32xf32>
    %c0_70 = arith.constant 0 : index
    %c0_71 = arith.constant 0 : index
    %c0_72 = arith.constant 0 : index
    %158 = vector.load %arg14[%c0_70, %c0_71, %c0_72] : memref<2x1x32xf32, #tpu.memory_space<vmem>>, vector<1x1x32xf32>
    %159 = vector.shape_cast %158 : vector<1x1x32xf32> to vector<1x32xf32>
    %160 = vector.broadcast %159 : vector<1x32xf32> to vector<8x32xf32>
    %161 = arith.addf %157, %160 : vector<8x32xf32>
    %162 = arith.addf %143, %161 : vector<8x32xf32>
    %c0_73 = arith.constant 0 : index
    %c0_74 = arith.constant 0 : index
    %c0_75 = arith.constant 0 : index
    %163 = vector.load %arg15[%c0_73, %c0_74, %c0_75] : memref<2x1x32xf32, #tpu.memory_space<vmem>>, vector<1x1x32xf32>
    %164 = vector.shape_cast %163 : vector<1x1x32xf32> to vector<1x32xf32>
    %c0_76 = arith.constant 0 : index
    %c0_77 = arith.constant 0 : index
    %c0_78 = arith.constant 0 : index
    %165 = vector.load %arg16[%c0_76, %c0_77, %c0_78] : memref<2x1x32xf32, #tpu.memory_space<vmem>>, vector<1x1x32xf32>
    %166 = vector.shape_cast %165 : vector<1x1x32xf32> to vector<1x32xf32>
    %cst_79 = arith.constant dense<0.000000e+00> : vector<8xf32>
    %167 = vector.multi_reduction <add>, %162, %cst_79 [1] : vector<8x32xf32> to vector<8xf32>
    %168 = vector.shape_cast %167 : vector<8xf32> to vector<8x1xf32>
    %cst_80 = arith.constant 3.200000e+01 : f32
    %169 = vector.broadcast %cst_80 : f32 to vector<8x1xf32>
    %170 = arith.divf %168, %169 : vector<8x1xf32>
    %171 = vector.broadcast %170 : vector<8x1xf32> to vector<8x32xf32>
    %172 = arith.subf %162, %171 : vector<8x32xf32>
    %173 = arith.mulf %172, %172 : vector<8x32xf32>
    %cst_81 = arith.constant dense<0.000000e+00> : vector<8xf32>
    %174 = vector.multi_reduction <add>, %173, %cst_81 [1] : vector<8x32xf32> to vector<8xf32>
    %175 = vector.shape_cast %174 : vector<8xf32> to vector<8x1xf32>
    %cst_82 = arith.constant 3.200000e+01 : f32
    %176 = vector.broadcast %cst_82 : f32 to vector<8x1xf32>
    %177 = arith.divf %175, %176 : vector<8x1xf32>
    %178 = vector.broadcast %170 : vector<8x1xf32> to vector<8x32xf32>
    %179 = arith.subf %162, %178 : vector<8x32xf32>
    %cst_83 = arith.constant 9.99999974E-6 : f32
    %180 = vector.broadcast %cst_83 : f32 to vector<8x1xf32>
    %181 = arith.addf %177, %180 : vector<8x1xf32>
    %182 = math.rsqrt %181 : vector<8x1xf32>
    %183 = vector.broadcast %182 : vector<8x1xf32> to vector<8x32xf32>
    %184 = arith.mulf %179, %183 : vector<8x32xf32>
    %185 = vector.broadcast %164 : vector<1x32xf32> to vector<8x32xf32>
    %186 = arith.mulf %184, %185 : vector<8x32xf32>
    %187 = vector.broadcast %166 : vector<1x32xf32> to vector<8x32xf32>
    %188 = arith.addf %186, %187 : vector<8x32xf32>
    %189 = arith.truncf %188 : vector<8x32xf32> to vector<8x32xbf16>
    %c1 = arith.constant 1 : index
    %c0_84 = arith.constant 0 : index
    %c0_85 = arith.constant 0 : index
    %190 = vector.load %arg5[%c1, %c0_84, %c0_85] : memref<2x32x96xbf16, #tpu.memory_space<vmem>>, vector<1x32x96xbf16>
    %191 = vector.shape_cast %190 : vector<1x32x96xbf16> to vector<32x96xbf16>
    %cst_86 = arith.constant dense<0.000000e+00> : vector<8x96xf32>
    %192 = tpu.matmul %189, %191, %cst_86 {dimension_numbers = #tpu.dot_dimension_numbers<[1], [0], [0], [1], [0, 0, 1, 1], [], []>} : vector<8x32xbf16>, vector<32x96xbf16>, vector<8x96xf32> -> vector<8x96xf32>
    %c1_87 = arith.constant 1 : index
    %c0_88 = arith.constant 0 : index
    %c0_89 = arith.constant 0 : index
    %193 = vector.load %arg6[%c1_87, %c0_88, %c0_89] : memref<2x1x96xf32, #tpu.memory_space<vmem>>, vector<1x1x96xf32>
    %194 = vector.shape_cast %193 : vector<1x1x96xf32> to vector<1x96xf32>
    %195 = vector.broadcast %194 : vector<1x96xf32> to vector<8x96xf32>
    %196 = arith.addf %192, %195 : vector<8x96xf32>
    %197 = vector.extract_strided_slice %196 {offsets = [0, 0], sizes = [8, 32], strides = [1, 1]} : vector<8x96xf32> to vector<8x32xf32>
    %198 = vector.extract_strided_slice %196 {offsets = [0, 32], sizes = [8, 32], strides = [1, 1]} : vector<8x96xf32> to vector<8x32xf32>
    %199 = vector.extract_strided_slice %196 {offsets = [0, 64], sizes = [8, 32], strides = [1, 1]} : vector<8x96xf32> to vector<8x32xf32>
    %200 = vector.extract_strided_slice %197 {offsets = [0, 0], sizes = [8, 8], strides = [1, 1]} : vector<8x32xf32> to vector<8x8xf32>
    %201 = vector.extract_strided_slice %198 {offsets = [0, 0], sizes = [8, 8], strides = [1, 1]} : vector<8x32xf32> to vector<8x8xf32>
    %202 = vector.extract_strided_slice %199 {offsets = [0, 0], sizes = [8, 8], strides = [1, 1]} : vector<8x32xf32> to vector<8x8xf32>
    %cst_90 = arith.constant dense<0.000000e+00> : vector<8x8xf32>
    %203 = tpu.matmul %200, %201, %cst_90 {dimension_numbers = #tpu.dot_dimension_numbers<[1], [1], [0], [0], [0, 0, 1, 0], [], []>} : vector<8x8xf32>, vector<8x8xf32>, vector<8x8xf32> -> vector<8x8xf32>
    %cst_91 = arith.constant 0.353553385 : f32
    %204 = vector.broadcast %cst_91 : f32 to vector<8x8xf32>
    %205 = arith.mulf %203, %204 : vector<8x8xf32>
    %cst_92 = arith.constant -1.000000e+09 : f32
    %206 = vector.shape_cast %16 : vector<1x8xi1> to vector<1x8xi1>
    %207 = vector.broadcast %206 : vector<1x8xi1> to vector<8x8xi1>
    %208 = vector.broadcast %cst_92 : f32 to vector<8x8xf32>
    %209 = arith.select %207, %205, %208 : vector<8x8xi1>, vector<8x8xf32>
    %cst_93 = arith.constant dense<0xFF800000> : vector<8xf32>
    %210 = vector.multi_reduction <maximumf>, %209, %cst_93 [1] : vector<8x8xf32> to vector<8xf32>
    %211 = vector.shape_cast %210 : vector<8xf32> to vector<8x1xf32>
    %212 = vector.broadcast %211 : vector<8x1xf32> to vector<8x8xf32>
    %213 = arith.subf %209, %212 : vector<8x8xf32>
    %214 = math.exp %213 : vector<8x8xf32>
    %cst_94 = arith.constant dense<0.000000e+00> : vector<8xf32>
    %215 = vector.multi_reduction <add>, %214, %cst_94 [1] : vector<8x8xf32> to vector<8xf32>
    %216 = vector.shape_cast %215 : vector<8xf32> to vector<8x1xf32>
    %217 = vector.broadcast %216 : vector<8x1xf32> to vector<8x8xf32>
    %218 = arith.divf %214, %217 : vector<8x8xf32>
    %cst_95 = arith.constant dense<0.000000e+00> : vector<8x8xf32>
    %219 = tpu.matmul %218, %202, %cst_95 {dimension_numbers = #tpu.dot_dimension_numbers<[1], [0], [0], [1], [0, 0, 1, 1], [], []>} : vector<8x8xf32>, vector<8x8xf32>, vector<8x8xf32> -> vector<8x8xf32>
    %220 = vector.extract_strided_slice %197 {offsets = [0, 8], sizes = [8, 8], strides = [1, 1]} : vector<8x32xf32> to vector<8x8xf32>
    %221 = vector.extract_strided_slice %198 {offsets = [0, 8], sizes = [8, 8], strides = [1, 1]} : vector<8x32xf32> to vector<8x8xf32>
    %222 = vector.extract_strided_slice %199 {offsets = [0, 8], sizes = [8, 8], strides = [1, 1]} : vector<8x32xf32> to vector<8x8xf32>
    %cst_96 = arith.constant dense<0.000000e+00> : vector<8x8xf32>
    %223 = tpu.matmul %220, %221, %cst_96 {dimension_numbers = #tpu.dot_dimension_numbers<[1], [1], [0], [0], [0, 0, 1, 0], [], []>} : vector<8x8xf32>, vector<8x8xf32>, vector<8x8xf32> -> vector<8x8xf32>
    %cst_97 = arith.constant 0.353553385 : f32
    %224 = vector.broadcast %cst_97 : f32 to vector<8x8xf32>
    %225 = arith.mulf %223, %224 : vector<8x8xf32>
    %cst_98 = arith.constant -1.000000e+09 : f32
    %226 = vector.shape_cast %16 : vector<1x8xi1> to vector<1x8xi1>
    %227 = vector.broadcast %226 : vector<1x8xi1> to vector<8x8xi1>
    %228 = vector.broadcast %cst_98 : f32 to vector<8x8xf32>
    %229 = arith.select %227, %225, %228 : vector<8x8xi1>, vector<8x8xf32>
    %cst_99 = arith.constant dense<0xFF800000> : vector<8xf32>
    %230 = vector.multi_reduction <maximumf>, %229, %cst_99 [1] : vector<8x8xf32> to vector<8xf32>
    %231 = vector.shape_cast %230 : vector<8xf32> to vector<8x1xf32>
    %232 = vector.broadcast %231 : vector<8x1xf32> to vector<8x8xf32>
    %233 = arith.subf %229, %232 : vector<8x8xf32>
    %234 = math.exp %233 : vector<8x8xf32>
    %cst_100 = arith.constant dense<0.000000e+00> : vector<8xf32>
    %235 = vector.multi_reduction <add>, %234, %cst_100 [1] : vector<8x8xf32> to vector<8xf32>
    %236 = vector.shape_cast %235 : vector<8xf32> to vector<8x1xf32>
    %237 = vector.broadcast %236 : vector<8x1xf32> to vector<8x8xf32>
    %238 = arith.divf %234, %237 : vector<8x8xf32>
    %cst_101 = arith.constant dense<0.000000e+00> : vector<8x8xf32>
    %239 = tpu.matmul %238, %222, %cst_101 {dimension_numbers = #tpu.dot_dimension_numbers<[1], [0], [0], [1], [0, 0, 1, 1], [], []>} : vector<8x8xf32>, vector<8x8xf32>, vector<8x8xf32> -> vector<8x8xf32>
    %240 = vector.extract_strided_slice %197 {offsets = [0, 16], sizes = [8, 8], strides = [1, 1]} : vector<8x32xf32> to vector<8x8xf32>
    %241 = vector.extract_strided_slice %198 {offsets = [0, 16], sizes = [8, 8], strides = [1, 1]} : vector<8x32xf32> to vector<8x8xf32>
    %242 = vector.extract_strided_slice %199 {offsets = [0, 16], sizes = [8, 8], strides = [1, 1]} : vector<8x32xf32> to vector<8x8xf32>
    %cst_102 = arith.constant dense<0.000000e+00> : vector<8x8xf32>
    %243 = tpu.matmul %240, %241, %cst_102 {dimension_numbers = #tpu.dot_dimension_numbers<[1], [1], [0], [0], [0, 0, 1, 0], [], []>} : vector<8x8xf32>, vector<8x8xf32>, vector<8x8xf32> -> vector<8x8xf32>
    %cst_103 = arith.constant 0.353553385 : f32
    %244 = vector.broadcast %cst_103 : f32 to vector<8x8xf32>
    %245 = arith.mulf %243, %244 : vector<8x8xf32>
    %cst_104 = arith.constant -1.000000e+09 : f32
    %246 = vector.shape_cast %16 : vector<1x8xi1> to vector<1x8xi1>
    %247 = vector.broadcast %246 : vector<1x8xi1> to vector<8x8xi1>
    %248 = vector.broadcast %cst_104 : f32 to vector<8x8xf32>
    %249 = arith.select %247, %245, %248 : vector<8x8xi1>, vector<8x8xf32>
    %cst_105 = arith.constant dense<0xFF800000> : vector<8xf32>
    %250 = vector.multi_reduction <maximumf>, %249, %cst_105 [1] : vector<8x8xf32> to vector<8xf32>
    %251 = vector.shape_cast %250 : vector<8xf32> to vector<8x1xf32>
    %252 = vector.broadcast %251 : vector<8x1xf32> to vector<8x8xf32>
    %253 = arith.subf %249, %252 : vector<8x8xf32>
    %254 = math.exp %253 : vector<8x8xf32>
    %cst_106 = arith.constant dense<0.000000e+00> : vector<8xf32>
    %255 = vector.multi_reduction <add>, %254, %cst_106 [1] : vector<8x8xf32> to vector<8xf32>
    %256 = vector.shape_cast %255 : vector<8xf32> to vector<8x1xf32>
    %257 = vector.broadcast %256 : vector<8x1xf32> to vector<8x8xf32>
    %258 = arith.divf %254, %257 : vector<8x8xf32>
    %cst_107 = arith.constant dense<0.000000e+00> : vector<8x8xf32>
    %259 = tpu.matmul %258, %242, %cst_107 {dimension_numbers = #tpu.dot_dimension_numbers<[1], [0], [0], [1], [0, 0, 1, 1], [], []>} : vector<8x8xf32>, vector<8x8xf32>, vector<8x8xf32> -> vector<8x8xf32>
    %260 = vector.extract_strided_slice %197 {offsets = [0, 24], sizes = [8, 8], strides = [1, 1]} : vector<8x32xf32> to vector<8x8xf32>
    %261 = vector.extract_strided_slice %198 {offsets = [0, 24], sizes = [8, 8], strides = [1, 1]} : vector<8x32xf32> to vector<8x8xf32>
    %262 = vector.extract_strided_slice %199 {offsets = [0, 24], sizes = [8, 8], strides = [1, 1]} : vector<8x32xf32> to vector<8x8xf32>
    %cst_108 = arith.constant dense<0.000000e+00> : vector<8x8xf32>
    %263 = tpu.matmul %260, %261, %cst_108 {dimension_numbers = #tpu.dot_dimension_numbers<[1], [1], [0], [0], [0, 0, 1, 0], [], []>} : vector<8x8xf32>, vector<8x8xf32>, vector<8x8xf32> -> vector<8x8xf32>
    %cst_109 = arith.constant 0.353553385 : f32
    %264 = vector.broadcast %cst_109 : f32 to vector<8x8xf32>
    %265 = arith.mulf %263, %264 : vector<8x8xf32>
    %cst_110 = arith.constant -1.000000e+09 : f32
    %266 = vector.shape_cast %16 : vector<1x8xi1> to vector<1x8xi1>
    %267 = vector.broadcast %266 : vector<1x8xi1> to vector<8x8xi1>
    %268 = vector.broadcast %cst_110 : f32 to vector<8x8xf32>
    %269 = arith.select %267, %265, %268 : vector<8x8xi1>, vector<8x8xf32>
    %cst_111 = arith.constant dense<0xFF800000> : vector<8xf32>
    %270 = vector.multi_reduction <maximumf>, %269, %cst_111 [1] : vector<8x8xf32> to vector<8xf32>
    %271 = vector.shape_cast %270 : vector<8xf32> to vector<8x1xf32>
    %272 = vector.broadcast %271 : vector<8x1xf32> to vector<8x8xf32>
    %273 = arith.subf %269, %272 : vector<8x8xf32>
    %274 = math.exp %273 : vector<8x8xf32>
    %cst_112 = arith.constant dense<0.000000e+00> : vector<8xf32>
    %275 = vector.multi_reduction <add>, %274, %cst_112 [1] : vector<8x8xf32> to vector<8xf32>
    %276 = vector.shape_cast %275 : vector<8xf32> to vector<8x1xf32>
    %277 = vector.broadcast %276 : vector<8x1xf32> to vector<8x8xf32>
    %278 = arith.divf %274, %277 : vector<8x8xf32>
    %cst_113 = arith.constant dense<0.000000e+00> : vector<8x8xf32>
    %279 = tpu.matmul %278, %262, %cst_113 {dimension_numbers = #tpu.dot_dimension_numbers<[1], [0], [0], [1], [0, 0, 1, 1], [], []>} : vector<8x8xf32>, vector<8x8xf32>, vector<8x8xf32> -> vector<8x8xf32>
    %280 = tpu.concatenate %219, %239, %259, %279 in 1 : vector<8x8xf32>, vector<8x8xf32>, vector<8x8xf32>, vector<8x8xf32> -> vector<8x32xf32>
    %281 = arith.truncf %280 : vector<8x32xf32> to vector<8x32xbf16>
    %c1_114 = arith.constant 1 : index
    %c0_115 = arith.constant 0 : index
    %c0_116 = arith.constant 0 : index
    %282 = vector.load %arg7[%c1_114, %c0_115, %c0_116] : memref<2x32x32xbf16, #tpu.memory_space<vmem>>, vector<1x32x32xbf16>
    %283 = vector.shape_cast %282 : vector<1x32x32xbf16> to vector<32x32xbf16>
    %cst_117 = arith.constant dense<0.000000e+00> : vector<8x32xf32>
    %284 = tpu.matmul %281, %283, %cst_117 {dimension_numbers = #tpu.dot_dimension_numbers<[1], [0], [0], [1], [0, 0, 1, 1], [], []>} : vector<8x32xbf16>, vector<32x32xbf16>, vector<8x32xf32> -> vector<8x32xf32>
    %c1_118 = arith.constant 1 : index
    %c0_119 = arith.constant 0 : index
    %c0_120 = arith.constant 0 : index
    %285 = vector.load %arg8[%c1_118, %c0_119, %c0_120] : memref<2x1x32xf32, #tpu.memory_space<vmem>>, vector<1x1x32xf32>
    %286 = vector.shape_cast %285 : vector<1x1x32xf32> to vector<1x32xf32>
    %287 = vector.broadcast %286 : vector<1x32xf32> to vector<8x32xf32>
    %288 = arith.addf %284, %287 : vector<8x32xf32>
    %289 = arith.addf %288, %188 : vector<8x32xf32>
    %c1_121 = arith.constant 1 : index
    %c0_122 = arith.constant 0 : index
    %c0_123 = arith.constant 0 : index
    %290 = vector.load %arg9[%c1_121, %c0_122, %c0_123] : memref<2x1x32xf32, #tpu.memory_space<vmem>>, vector<1x1x32xf32>
    %291 = vector.shape_cast %290 : vector<1x1x32xf32> to vector<1x32xf32>
    %c1_124 = arith.constant 1 : index
    %c0_125 = arith.constant 0 : index
    %c0_126 = arith.constant 0 : index
    %292 = vector.load %arg10[%c1_124, %c0_125, %c0_126] : memref<2x1x32xf32, #tpu.memory_space<vmem>>, vector<1x1x32xf32>
    %293 = vector.shape_cast %292 : vector<1x1x32xf32> to vector<1x32xf32>
    %cst_127 = arith.constant dense<0.000000e+00> : vector<8xf32>
    %294 = vector.multi_reduction <add>, %289, %cst_127 [1] : vector<8x32xf32> to vector<8xf32>
    %295 = vector.shape_cast %294 : vector<8xf32> to vector<8x1xf32>
    %cst_128 = arith.constant 3.200000e+01 : f32
    %296 = vector.broadcast %cst_128 : f32 to vector<8x1xf32>
    %297 = arith.divf %295, %296 : vector<8x1xf32>
    %298 = vector.broadcast %297 : vector<8x1xf32> to vector<8x32xf32>
    %299 = arith.subf %289, %298 : vector<8x32xf32>
    %300 = arith.mulf %299, %299 : vector<8x32xf32>
    %cst_129 = arith.constant dense<0.000000e+00> : vector<8xf32>
    %301 = vector.multi_reduction <add>, %300, %cst_129 [1] : vector<8x32xf32> to vector<8xf32>
    %302 = vector.shape_cast %301 : vector<8xf32> to vector<8x1xf32>
    %cst_130 = arith.constant 3.200000e+01 : f32
    %303 = vector.broadcast %cst_130 : f32 to vector<8x1xf32>
    %304 = arith.divf %302, %303 : vector<8x1xf32>
    %305 = vector.broadcast %297 : vector<8x1xf32> to vector<8x32xf32>
    %306 = arith.subf %289, %305 : vector<8x32xf32>
    %cst_131 = arith.constant 9.99999974E-6 : f32
    %307 = vector.broadcast %cst_131 : f32 to vector<8x1xf32>
    %308 = arith.addf %304, %307 : vector<8x1xf32>
    %309 = math.rsqrt %308 : vector<8x1xf32>
    %310 = vector.broadcast %309 : vector<8x1xf32> to vector<8x32xf32>
    %311 = arith.mulf %306, %310 : vector<8x32xf32>
    %312 = vector.broadcast %291 : vector<1x32xf32> to vector<8x32xf32>
    %313 = arith.mulf %311, %312 : vector<8x32xf32>
    %314 = vector.broadcast %293 : vector<1x32xf32> to vector<8x32xf32>
    %315 = arith.addf %313, %314 : vector<8x32xf32>
    %316 = arith.truncf %315 : vector<8x32xf32> to vector<8x32xbf16>
    %c1_132 = arith.constant 1 : index
    %c0_133 = arith.constant 0 : index
    %c0_134 = arith.constant 0 : index
    %317 = vector.load %arg11[%c1_132, %c0_133, %c0_134] : memref<2x32x32xbf16, #tpu.memory_space<vmem>>, vector<1x32x32xbf16>
    %318 = vector.shape_cast %317 : vector<1x32x32xbf16> to vector<32x32xbf16>
    %cst_135 = arith.constant dense<0.000000e+00> : vector<8x32xf32>
    %319 = tpu.matmul %316, %318, %cst_135 {dimension_numbers = #tpu.dot_dimension_numbers<[1], [0], [0], [1], [0, 0, 1, 1], [], []>} : vector<8x32xbf16>, vector<32x32xbf16>, vector<8x32xf32> -> vector<8x32xf32>
    %c1_136 = arith.constant 1 : index
    %c0_137 = arith.constant 0 : index
    %c0_138 = arith.constant 0 : index
    %320 = vector.load %arg12[%c1_136, %c0_137, %c0_138] : memref<2x1x32xf32, #tpu.memory_space<vmem>>, vector<1x1x32xf32>
    %321 = vector.shape_cast %320 : vector<1x1x32xf32> to vector<1x32xf32>
    %322 = vector.broadcast %321 : vector<1x32xf32> to vector<8x32xf32>
    %323 = arith.addf %319, %322 : vector<8x32xf32>
    %cst_139 = arith.constant 0.000000e+00 : f32
    %324 = vector.broadcast %cst_139 : f32 to vector<8x32xf32>
    %325 = arith.maximumf %323, %324 : vector<8x32xf32>
    %326 = arith.truncf %325 : vector<8x32xf32> to vector<8x32xbf16>
    %c1_140 = arith.constant 1 : index
    %c0_141 = arith.constant 0 : index
    %c0_142 = arith.constant 0 : index
    %327 = vector.load %arg13[%c1_140, %c0_141, %c0_142] : memref<2x32x32xbf16, #tpu.memory_space<vmem>>, vector<1x32x32xbf16>
    %328 = vector.shape_cast %327 : vector<1x32x32xbf16> to vector<32x32xbf16>
    %cst_143 = arith.constant dense<0.000000e+00> : vector<8x32xf32>
    %329 = tpu.matmul %326, %328, %cst_143 {dimension_numbers = #tpu.dot_dimension_numbers<[1], [0], [0], [1], [0, 0, 1, 1], [], []>} : vector<8x32xbf16>, vector<32x32xbf16>, vector<8x32xf32> -> vector<8x32xf32>
    %c1_144 = arith.constant 1 : index
    %c0_145 = arith.constant 0 : index
    %c0_146 = arith.constant 0 : index
    %330 = vector.load %arg14[%c1_144, %c0_145, %c0_146] : memref<2x1x32xf32, #tpu.memory_space<vmem>>, vector<1x1x32xf32>
    %331 = vector.shape_cast %330 : vector<1x1x32xf32> to vector<1x32xf32>
    %332 = vector.broadcast %331 : vector<1x32xf32> to vector<8x32xf32>
    %333 = arith.addf %329, %332 : vector<8x32xf32>
    %334 = arith.addf %315, %333 : vector<8x32xf32>
    %c1_147 = arith.constant 1 : index
    %c0_148 = arith.constant 0 : index
    %c0_149 = arith.constant 0 : index
    %335 = vector.load %arg15[%c1_147, %c0_148, %c0_149] : memref<2x1x32xf32, #tpu.memory_space<vmem>>, vector<1x1x32xf32>
    %336 = vector.shape_cast %335 : vector<1x1x32xf32> to vector<1x32xf32>
    %c1_150 = arith.constant 1 : index
    %c0_151 = arith.constant 0 : index
    %c0_152 = arith.constant 0 : index
    %337 = vector.load %arg16[%c1_150, %c0_151, %c0_152] : memref<2x1x32xf32, #tpu.memory_space<vmem>>, vector<1x1x32xf32>
    %338 = vector.shape_cast %337 : vector<1x1x32xf32> to vector<1x32xf32>
    %cst_153 = arith.constant dense<0.000000e+00> : vector<8xf32>
    %339 = vector.multi_reduction <add>, %334, %cst_153 [1] : vector<8x32xf32> to vector<8xf32>
    %340 = vector.shape_cast %339 : vector<8xf32> to vector<8x1xf32>
    %cst_154 = arith.constant 3.200000e+01 : f32
    %341 = vector.broadcast %cst_154 : f32 to vector<8x1xf32>
    %342 = arith.divf %340, %341 : vector<8x1xf32>
    %343 = vector.broadcast %342 : vector<8x1xf32> to vector<8x32xf32>
    %344 = arith.subf %334, %343 : vector<8x32xf32>
    %345 = arith.mulf %344, %344 : vector<8x32xf32>
    %cst_155 = arith.constant dense<0.000000e+00> : vector<8xf32>
    %346 = vector.multi_reduction <add>, %345, %cst_155 [1] : vector<8x32xf32> to vector<8xf32>
    %347 = vector.shape_cast %346 : vector<8xf32> to vector<8x1xf32>
    %cst_156 = arith.constant 3.200000e+01 : f32
    %348 = vector.broadcast %cst_156 : f32 to vector<8x1xf32>
    %349 = arith.divf %347, %348 : vector<8x1xf32>
    %350 = vector.broadcast %342 : vector<8x1xf32> to vector<8x32xf32>
    %351 = arith.subf %334, %350 : vector<8x32xf32>
    %cst_157 = arith.constant 9.99999974E-6 : f32
    %352 = vector.broadcast %cst_157 : f32 to vector<8x1xf32>
    %353 = arith.addf %349, %352 : vector<8x1xf32>
    %354 = math.rsqrt %353 : vector<8x1xf32>
    %355 = vector.broadcast %354 : vector<8x1xf32> to vector<8x32xf32>
    %356 = arith.mulf %351, %355 : vector<8x32xf32>
    %357 = vector.broadcast %336 : vector<1x32xf32> to vector<8x32xf32>
    %358 = arith.mulf %356, %357 : vector<8x32xf32>
    %359 = vector.broadcast %338 : vector<1x32xf32> to vector<8x32xf32>
    %360 = arith.addf %358, %359 : vector<8x32xf32>
    %c0_158 = arith.constant 0 : index
    %c0_159 = arith.constant 0 : index
    %c0_160 = arith.constant 0 : index
    %361 = vector.load %arg17[%c0_158, %c0_159, %c0_160] : memref<1x8x32xf32, #tpu.memory_space<vmem>>, vector<1x8x32xf32>
    %362 = vector.shape_cast %361 : vector<1x8x32xf32> to vector<8x32xf32>
    %363 = vector.shape_cast %360 : vector<8x32xf32> to vector<1x8x32xf32>
    tpu.vector_store %arg17[%c0_158, %c0_159, %c0_160], %363 {strides = array<i32>} : memref<1x8x32xf32, #tpu.memory_space<vmem>>, vector<1x8x32xf32>,
    return
  }
  func.func @transform_0(%arg0: i32) -> (i32, i32, i32) {
    %c0_i32 = arith.constant 0 : i32
    %c0_i32_0 = arith.constant 0 : i32
    %c0_i32_1 = arith.constant 0 : i32
    return %arg0, %c0_i32, %c0_i32_0 : i32, i32, i32
  }
  func.func @transform_1(%arg0: i32) -> (i32, i32) {
    %c0_i32 = arith.constant 0 : i32
    %c0_i32_0 = arith.constant 0 : i32
    %c0_i32_1 = arith.constant 0 : i32
    return %c0_i32, %c0_i32_0 : i32, i32
  }
  func.func @transform_2(%arg0: i32) -> (i32, i32) {
    %c0_i32 = arith.constant 0 : i32
    %c0_i32_0 = arith.constant 0 : i32
    %c0_i32_1 = arith.constant 0 : i32
    return %c0_i32, %c0_i32_0 : i32, i32
  }
  func.func @transform_3(%arg0: i32) -> (i32, i32, i32) {
    %c0_i32 = arith.constant 0 : i32
    %c0_i32_0 = arith.constant 0 : i32
    %c0_i32_1 = arith.constant 0 : i32
    return %arg0, %c0_i32, %c0_i32_0 : i32, i32, i32
  }
  func.func @transform_4(%arg0: i32) -> (i32, i32, i32) {
    %c0_i32 = arith.constant 0 : i32
    %c0_i32_0 = arith.constant 0 : i32
    %c0_i32_1 = arith.constant 0 : i32
    %c0_i32_2 = arith.constant 0 : i32
    return %c0_i32, %c0_i32_0, %c0_i32_1 : i32, i32, i32
  }
  func.func @transform_5(%arg0: i32) -> (i32, i32, i32) {
    %c0_i32 = arith.constant 0 : i32
    %c0_i32_0 = arith.constant 0 : i32
    %c0_i32_1 = arith.constant 0 : i32
    %c0_i32_2 = arith.constant 0 : i32
    return %c0_i32, %c0_i32_0, %c0_i32_1 : i32, i32, i32
  }
  func.func @transform_6(%arg0: i32) -> (i32, i32, i32) {
    %c0_i32 = arith.constant 0 : i32
    %c0_i32_0 = arith.constant 0 : i32
    %c0_i32_1 = arith.constant 0 : i32
    %c0_i32_2 = arith.constant 0 : i32
    return %c0_i32, %c0_i32_0, %c0_i32_1 : i32, i32, i32
  }
  func.func @transform_7(%arg0: i32) -> (i32, i32, i32) {
    %c0_i32 = arith.constant 0 : i32
    %c0_i32_0 = arith.constant 0 : i32
    %c0_i32_1 = arith.constant 0 : i32
    %c0_i32_2 = arith.constant 0 : i32
    return %c0_i32, %c0_i32_0, %c0_i32_1 : i32, i32, i32
  }
  func.func @transform_8(%arg0: i32) -> (i32, i32, i32) {
    %c0_i32 = arith.constant 0 : i32
    %c0_i32_0 = arith.constant 0 : i32
    %c0_i32_1 = arith.constant 0 : i32
    %c0_i32_2 = arith.constant 0 : i32
    return %c0_i32, %c0_i32_0, %c0_i32_1 : i32, i32, i32
  }
  func.func @transform_9(%arg0: i32) -> (i32, i32, i32) {
    %c0_i32 = arith.constant 0 : i32
    %c0_i32_0 = arith.constant 0 : i32
    %c0_i32_1 = arith.constant 0 : i32
    %c0_i32_2 = arith.constant 0 : i32
    return %c0_i32, %c0_i32_0, %c0_i32_1 : i32, i32, i32
  }
  func.func @transform_10(%arg0: i32) -> (i32, i32, i32) {
    %c0_i32 = arith.constant 0 : i32
    %c0_i32_0 = arith.constant 0 : i32
    %c0_i32_1 = arith.constant 0 : i32
    %c0_i32_2 = arith.constant 0 : i32
    return %c0_i32, %c0_i32_0, %c0_i32_1 : i32, i32, i32
  }
  func.func @transform_11(%arg0: i32) -> (i32, i32, i32) {
    %c0_i32 = arith.constant 0 : i32
    %c0_i32_0 = arith.constant 0 : i32
    %c0_i32_1 = arith.constant 0 : i32
    %c0_i32_2 = arith.constant 0 : i32
    return %c0_i32, %c0_i32_0, %c0_i32_1 : i32, i32, i32
  }
  func.func @transform_12(%arg0: i32) -> (i32, i32, i32) {
    %c0_i32 = arith.constant 0 : i32
    %c0_i32_0 = arith.constant 0 : i32
    %c0_i32_1 = arith.constant 0 : i32
    %c0_i32_2 = arith.constant 0 : i32
    return %c0_i32, %c0_i32_0, %c0_i32_1 : i32, i32, i32
  }
  func.func @transform_13(%arg0: i32) -> (i32, i32, i32) {
    %c0_i32 = arith.constant 0 : i32
    %c0_i32_0 = arith.constant 0 : i32
    %c0_i32_1 = arith.constant 0 : i32
    %c0_i32_2 = arith.constant 0 : i32
    return %c0_i32, %c0_i32_0, %c0_i32_1 : i32, i32, i32
  }
  func.func @transform_14(%arg0: i32) -> (i32, i32, i32) {
    %c0_i32 = arith.constant 0 : i32
    %c0_i32_0 = arith.constant 0 : i32
    %c0_i32_1 = arith.constant 0 : i32
    %c0_i32_2 = arith.constant 0 : i32
    return %c0_i32, %c0_i32_0, %c0_i32_1 : i32, i32, i32
  }
  func.func @transform_15(%arg0: i32) -> (i32, i32, i32) {
    %c0_i32 = arith.constant 0 : i32
    %c0_i32_0 = arith.constant 0 : i32
    %c0_i32_1 = arith.constant 0 : i32
    %c0_i32_2 = arith.constant 0 : i32
    return %c0_i32, %c0_i32_0, %c0_i32_1 : i32, i32, i32
  }
  func.func @transform_16(%arg0: i32) -> (i32, i32, i32) {
    %c0_i32 = arith.constant 0 : i32
    %c0_i32_0 = arith.constant 0 : i32
    %c0_i32_1 = arith.constant 0 : i32
    return %arg0, %c0_i32, %c0_i32_0 : i32, i32, i32
  }
}

</mosaic_0001>

<llo_original>
// kernel: tpu_custom_call.1
$region0: #{tpu_custom_call.1}
  #allocation0 [shape = 'u32[]', space=smem, size = 0x4, offset = 0x4, fixed_abs, tag = 'smem constant byte address 0x4 - core index']
  #allocation1 [shape = 'u32[72,128]{1,0:T(1,128)}', space=vmem, size = 0x9000, scoped, tag = 'internal scratch']
  %s0 = inlined_call_operand.hbm [shape: f32[2,8,32], index: 0, kind: input, shape index: {}]
  %s1 = inlined_call_operand.hbm [shape: f32[8,16], index: 1, kind: input, shape index: {}]
  %s2 = inlined_call_operand.hbm [shape: f32[8,16], index: 2, kind: input, shape index: {}]
  %s3 = inlined_call_operand.vmem [shape: f32[2,1,8], index: 3, kind: input, shape index: {}]
  %s4 = inlined_call_operand.hbm [shape: bf16[2,32,96], index: 4, kind: input, shape index: {}]
  %s5 = inlined_call_operand.vmem [shape: f32[2,1,96], index: 5, kind: input, shape index: {}]
  %s6 = inlined_call_operand.hbm [shape: bf16[2,32,32], index: 6, kind: input, shape index: {}]
  %s7 = inlined_call_operand.vmem [shape: f32[2,1,32], index: 7, kind: input, shape index: {}]
  %s8 = inlined_call_operand.hbm [shape: f32[2,1,32], index: 8, kind: input, shape index: {}]
  %s9 = inlined_call_operand.vmem [shape: f32[2,1,32], index: 9, kind: input, shape index: {}]
  %s10 = inlined_call_operand.hbm [shape: bf16[2,32,32], index: 10, kind: input, shape index: {}]
  %s11 = inlined_call_operand.vmem [shape: f32[2,1,32], index: 11, kind: input, shape index: {}]
  %s12 = inlined_call_operand.hbm [shape: bf16[2,32,32], index: 12, kind: input, shape index: {}]
  %s13 = inlined_call_operand.vmem [shape: f32[2,1,32], index: 13, kind: input, shape index: {}]
  %s14 = inlined_call_operand.hbm [shape: f32[2,1,32], index: 14, kind: input, shape index: {}]
  %s15 = inlined_call_operand.vmem [shape: f32[2,1,32], index: 15, kind: input, shape index: {}]
  %s16 = inlined_call_operand.hbm [shape: f32[2,8,32], index: 16, kind: output, shape index: {}]
  %s17 = sld [smem:[#allocation0]]
  $region133: #{tpu_custom_call.1} parent=0
    _
  %s19 = ssub.s32 1, %s17
  %s20 = scalar_select 0, %s19, %s17
  $region1: #{tpu_custom_call.1} parent=0
    #allocation2 [shape = 'u8[8192]{0}', space=vmem, size = 0x2000, scoped, tag = 'input window, operand 0']
    #allocation3 [shape = 's32[2]{0}', space=sflag, size = 0x8, scoped, tag = 'scoped memory for tpu_custom_call.1']
    #allocation4 [shape = 's32[2]{0}', space=sflag, size = 0x8, scoped, tag = 'scoped memory for tpu_custom_call.1']
    #allocation5 [shape = 'u8[4096]{0}', space=vmem, size = 0x1000, scoped, tag = 'input window, operand 1, single buffered']
    #allocation6 [shape = 's32[1]{0}', space=sflag, size = 0x4, scoped, tag = 'scoped memory for tpu_custom_call.1']
    #allocation7 [shape = 'u8[4096]{0}', space=vmem, size = 0x1000, scoped, tag = 'input window, operand 2, single buffered']
    #allocation8 [shape = 'u8[16384]{0}', space=vmem, size = 0x4000, scoped, tag = 'input window, operand 4, single buffered']
    #allocation9 [shape = 's32[1]{0}', space=sflag, size = 0x4, scoped, tag = 'scoped memory for tpu_custom_call.1']
    #allocation10 [shape = 'u8[16384]{0}', space=vmem, size = 0x4000, scoped, tag = 'input window, operand 6, single buffered']
    #allocation11 [shape = 'u8[1024]{0}', space=vmem, size = 0x400, scoped, tag = 'input window, operand 8, single buffered']
    #allocation12 [shape = 's32[1]{0}', space=sflag, size = 0x4, scoped, tag = 'scoped memory for tpu_custom_call.1']
    #allocation13 [shape = 'u8[16384]{0}', space=vmem, size = 0x4000, scoped, tag = 'input window, operand 10, single buffered']
    #allocation14 [shape = 'u8[16384]{0}', space=vmem, size = 0x4000, scoped, tag = 'input window, operand 12, single buffered']
    #allocation15 [shape = 's32[1]{0}', space=sflag, size = 0x4, scoped, tag = 'scoped memory for tpu_custom_call.1']
    #allocation16 [shape = 'u8[1024]{0}', space=vmem, size = 0x400, scoped, tag = 'input window, operand 14, single buffered']
    #allocation17 [shape = 'u8[8192]{0}', space=vmem, size = 0x2000, scoped, tag = 'output window, operand 0']
    %21 = vsyncpa [#allocation3], 0
    %s22 = scalar_lea.sflag [#allocation3], 1
    %23 = vsyncpa %s22, 0
    %24 = vsyncpa [#allocation6], 0
    %25 = vsyncpa [#allocation9], 0
    %26 = vsyncpa [#allocation12], 0
    %27 = vsyncpa [#allocation15], 0
    %28 = vsyncpa [#allocation4], 0
    %s29 = scalar_lea.sflag [#allocation4], 1
    %30 = vsyncpa %s29, 0
    loop: start=0, step=1, limit=4
    $region2: #{tpu_custom_call.1} parent=1 // loop_pre_header
      _
    $region3: #{tpu_custom_call.1} parent=1 // loop_header
      %s32 = sphi 0, %s36
      %p33 = scmp.ge.s32.totalorder %s32, 4
      %s42 = sphi 0, %s44
      %s45 = sphi 0, %s42
      %s46 = sphi 0, %s45
      %s62 = sphi 0, %s46
      %s66 = sphi 0, %s66
      %s68 = sphi 0, %s66
      %s69 = sphi 0, %s68
      %s83 = sphi 0, %s69
      %s87 = sphi 0, %s87
      %s89 = sphi 0, %s87
      %s90 = sphi 0, %s89
      %s104 = sphi 0, %s90
      %s110 = sphi 0, %s112
      %s113 = sphi 0, %s110
      %s114 = sphi 0, %s113
      %s130 = sphi 0, %s114
      %s134 = sphi 0, %s134
      %s136 = sphi 0, %s134
      %s137 = sphi 0, %s136
      %s151 = sphi 0, %s137
      %s155 = sphi 0, %s155
      %s157 = sphi 0, %s155
      %s158 = sphi 0, %s157
      %s172 = sphi 0, %s158
      %s176 = sphi 0, %s176
      %s178 = sphi 0, %s176
      %s179 = sphi 0, %s178
      %s193 = sphi 0, %s179
      %s197 = sphi 0, %s197
      %s199 = sphi 0, %s197
      %s200 = sphi 0, %s199
      %s214 = sphi 0, %s200
      %s218 = sphi 0, %s218
      %s220 = sphi 0, %s218
      %s221 = sphi 0, %s220
      %s235 = sphi 0, %s221
      %s239 = sphi 0, %s239
      %s241 = sphi 0, %s239
      %s242 = sphi 0, %s241
      %s256 = sphi 0, %s242
      %s260 = sphi 0, %s260
      %s262 = sphi 0, %s260
      %s263 = sphi 0, %s262
      %s277 = sphi 0, %s263
      %s281 = sphi 0, %s281
      %s283 = sphi 0, %s281
      %s284 = sphi 0, %s283
      %s298 = sphi 0, %s284
      %s302 = sphi 0, %s302
      %s304 = sphi 0, %s302
      %s305 = sphi 0, %s304
      %s319 = sphi 0, %s305
      %s323 = sphi 0, %s323
      %s325 = sphi 0, %s323
      %s326 = sphi 0, %s325
      %s340 = sphi 0, %s326
      %s344 = sphi 0, %s344
      %s346 = sphi 0, %s344
      %s347 = sphi 0, %s346
      %s361 = sphi 0, %s347
      %s365 = sphi 0, %s365
      %s367 = sphi 0, %s365
      %s368 = sphi 0, %s367
      %s382 = sphi 0, %s368
      %s388 = sphi 0, %s390
      %s391 = sphi 0, %s388
      %s392 = sphi 0, %s391
      %s408 = sphi 0, %s392
    $region4: #{tpu_custom_call.1} parent=1 // loop_header_branch
      %35 = sbr.rel (%p33) target = $region8
    $region5: #{tpu_custom_call.1} parent=1 // loop_body
      %s37 = ssub.s32 %s32, 1
      %s38 = ssub.s32 %s32, 2
      %s39 = sadd.s32 %s32, 1
      %s40 = ssub.s32 %s32, %s39
      %p41 = scmp.eq.s32.totalorder %s40, 0
      %s43 = sadd.s32 %s42, 1
      %s44 = scalar_select %p41, %s42, %s43
      %p47 = pneg %p41
      %p48 = scmp.eq.s32.totalorder %s32, 1
      %p49 = por %p47, %p48
      %p50 = scmp.ne.s32.totalorder %s42, %s45
      %p51 = scmp.eq.s32.totalorder %s32, 0
      %p52 = por %p50, %p51
      %p53 = scmp.ne.s32.totalorder %s42, %s45
      %p54 = scmp.eq.s32.totalorder %s37, 1
      %p55 = por %p53, %p54
      %p56 = scmp.ne.s32.totalorder %s45, %s46
      %p57 = scmp.eq.s32.totalorder %s37, 0
      %p58 = por %p56, %p57
      %p59 = scmp.ne.s32.totalorder %s45, %s46
      %p60 = scmp.eq.s32.totalorder %s38, 1
      %p61 = por %p59, %p60
      %p63 = scmp.ne.s32.totalorder %s46, %s62
      %p64 = scmp.eq.s32.totalorder %s38, 0
      %p65 = por %p63, %p64
      %s67 = sadd.s32 %s66, 1
      %p70 = scmp.eq.s32.totalorder %s32, 1
      %p71 = scmp.ne.s32.totalorder %s66, %s68
      %p72 = scmp.eq.s32.totalorder %s32, 0
      %p73 = por %p71, %p72
      %p74 = scmp.ne.s32.totalorder %s66, %s68
      %p75 = scmp.eq.s32.totalorder %s37, 1
      %p76 = por %p74, %p75
      %p77 = scmp.ne.s32.totalorder %s68, %s69
      %p78 = scmp.eq.s32.totalorder %s37, 0
      %p79 = por %p77, %p78
      %p80 = scmp.ne.s32.totalorder %s68, %s69
      %p81 = scmp.eq.s32.totalorder %s38, 1
      %p82 = por %p80, %p81
      %p84 = scmp.ne.s32.totalorder %s69, %s83
      %p85 = scmp.eq.s32.totalorder %s38, 0
      %p86 = por %p84, %p85
      %s88 = sadd.s32 %s87, 1
      %p91 = scmp.eq.s32.totalorder %s32, 1
      %p92 = scmp.ne.s32.totalorder %s87, %s89
      %p93 = scmp.eq.s32.totalorder %s32, 0
      %p94 = por %p92, %p93
      %p95 = scmp.ne.s32.totalorder %s87, %s89
      %p96 = scmp.eq.s32.totalorder %s37, 1
      %p97 = por %p95, %p96
      %p98 = scmp.ne.s32.totalorder %s89, %s90
      %p99 = scmp.eq.s32.totalorder %s37, 0
      %p100 = por %p98, %p99
      %p101 = scmp.ne.s32.totalorder %s89, %s90
      %p102 = scmp.eq.s32.totalorder %s38, 1
      %p103 = por %p101, %p102
      %p105 = scmp.ne.s32.totalorder %s90, %s104
      %p106 = scmp.eq.s32.totalorder %s38, 0
      %p107 = por %p105, %p106
      %s108 = ssub.s32 %s32, %s39
      %p109 = scmp.eq.s32.totalorder %s108, 0
      %s111 = sadd.s32 %s110, 1
      %s112 = scalar_select %p109, %s110, %s111
      %p115 = pneg %p109
      %p116 = scmp.eq.s32.totalorder %s32, 1
      %p117 = por %p115, %p116
      %p118 = scmp.ne.s32.totalorder %s110, %s113
      %p119 = scmp.eq.s32.totalorder %s32, 0
      %p120 = por %p118, %p119
      %p121 = scmp.ne.s32.totalorder %s110, %s113
      %p122 = scmp.eq.s32.totalorder %s37, 1
      %p123 = por %p121, %p122
      %p124 = scmp.ne.s32.totalorder %s113, %s114
      %p125 = scmp.eq.s32.totalorder %s37, 0
      %p126 = por %p124, %p125
      %p127 = scmp.ne.s32.totalorder %s113, %s114
      %p128 = scmp.eq.s32.totalorder %s38, 1
      %p129 = por %p127, %p128
      %p131 = scmp.ne.s32.totalorder %s114, %s130
      %p132 = scmp.eq.s32.totalorder %s38, 0
      %p133 = por %p131, %p132
      %s135 = sadd.s32 %s134, 1
      %p138 = scmp.eq.s32.totalorder %s32, 1
      %p139 = scmp.ne.s32.totalorder %s134, %s136
      %p140 = scmp.eq.s32.totalorder %s32, 0
      %p141 = por %p139, %p140
      %p142 = scmp.ne.s32.totalorder %s134, %s136
      %p143 = scmp.eq.s32.totalorder %s37, 1
      %p144 = por %p142, %p143
      %p145 = scmp.ne.s32.totalorder %s136, %s137
      %p146 = scmp.eq.s32.totalorder %s37, 0
      %p147 = por %p145, %p146
      %p148 = scmp.ne.s32.totalorder %s136, %s137
      %p149 = scmp.eq.s32.totalorder %s38, 1
      %p150 = por %p148, %p149
      %p152 = scmp.ne.s32.totalorder %s137, %s151
      %p153 = scmp.eq.s32.totalorder %s38, 0
      %p154 = por %p152, %p153
      %s156 = sadd.s32 %s155, 1
      %p159 = scmp.eq.s32.totalorder %s32, 1
      %p160 = scmp.ne.s32.totalorder %s155, %s157
      %p161 = scmp.eq.s32.totalorder %s32, 0
      %p162 = por %p160, %p161
      %p163 = scmp.ne.s32.totalorder %s155, %s157
      %p164 = scmp.eq.s32.totalorder %s37, 1
      %p165 = por %p163, %p164
      %p166 = scmp.ne.s32.totalorder %s157, %s158
      %p167 = scmp.eq.s32.totalorder %s37, 0
      %p168 = por %p166, %p167
      %p169 = scmp.ne.s32.totalorder %s157, %s158
      %p170 = scmp.eq.s32.totalorder %s38, 1
      %p171 = por %p169, %p170
      %p173 = scmp.ne.s32.totalorder %s158, %s172
      %p174 = scmp.eq.s32.totalorder %s38, 0
      %p175 = por %p173, %p174
      %s177 = sadd.s32 %s176, 1
      %p180 = scmp.eq.s32.totalorder %s32, 1
      %p181 = scmp.ne.s32.totalorder %s176, %s178
      %p182 = scmp.eq.s32.totalorder %s32, 0
      %p183 = por %p181, %p182
      %p184 = scmp.ne.s32.totalorder %s176, %s178
      %p185 = scmp.eq.s32.totalorder %s37, 1
      %p186 = por %p184, %p185
      %p187 = scmp.ne.s32.totalorder %s178, %s179
      %p188 = scmp.eq.s32.totalorder %s37, 0
      %p189 = por %p187, %p188
      %p190 = scmp.ne.s32.totalorder %s178, %s179
      %p191 = scmp.eq.s32.totalorder %s38, 1
      %p192 = por %p190, %p191
      %p194 = scmp.ne.s32.totalorder %s179, %s193
      %p195 = scmp.eq.s32.totalorder %s38, 0
      %p196 = por %p194, %p195
      %s198 = sadd.s32 %s197, 1
      %p201 = scmp.eq.s32.totalorder %s32, 1
      %p202 = scmp.ne.s32.totalorder %s197, %s199
      %p203 = scmp.eq.s32.totalorder %s32, 0
      %p204 = por %p202, %p203
      %p205 = scmp.ne.s32.totalorder %s197, %s199
      %p206 = scmp.eq.s32.totalorder %s37, 1
      %p207 = por %p205, %p206
      %p208 = scmp.ne.s32.totalorder %s199, %s200
      %p209 = scmp.eq.s32.totalorder %s37, 0
      %p210 = por %p208, %p209
      %p211 = scmp.ne.s32.totalorder %s199, %s200
      %p212 = scmp.eq.s32.totalorder %s38, 1
      %p213 = por %p211, %p212
      %p215 = scmp.ne.s32.totalorder %s200, %s214
      %p216 = scmp.eq.s32.totalorder %s38, 0
      %p217 = por %p215, %p216
      %s219 = sadd.s32 %s218, 1
      %p222 = scmp.eq.s32.totalorder %s32, 1
      %p223 = scmp.ne.s32.totalorder %s218, %s220
      %p224 = scmp.eq.s32.totalorder %s32, 0
      %p225 = por %p223, %p224
      %p226 = scmp.ne.s32.totalorder %s218, %s220
      %p227 = scmp.eq.s32.totalorder %s37, 1
      %p228 = por %p226, %p227
      %p229 = scmp.ne.s32.totalorder %s220, %s221
      %p230 = scmp.eq.s32.totalorder %s37, 0
      %p231 = por %p229, %p230
      %p232 = scmp.ne.s32.totalorder %s220, %s221
      %p233 = scmp.eq.s32.totalorder %s38, 1
      %p234 = por %p232, %p233
      %p236 = scmp.ne.s32.totalorder %s221, %s235
      %p237 = scmp.eq.s32.totalorder %s38, 0
      %p238 = por %p236, %p237
      %s240 = sadd.s32 %s239, 1
      %p243 = scmp.eq.s32.totalorder %s32, 1
      %p244 = scmp.ne.s32.totalorder %s239, %s241
      %p245 = scmp.eq.s32.totalorder %s32, 0
      %p246 = por %p244, %p245
      %p247 = scmp.ne.s32.totalorder %s239, %s241
      %p248 = scmp.eq.s32.totalorder %s37, 1
      %p249 = por %p247, %p248
      %p250 = scmp.ne.s32.totalorder %s241, %s242
      %p251 = scmp.eq.s32.totalorder %s37, 0
      %p252 = por %p250, %p251
      %p253 = scmp.ne.s32.totalorder %s241, %s242
      %p254 = scmp.eq.s32.totalorder %s38, 1
      %p255 = por %p253, %p254
      %p257 = scmp.ne.s32.totalorder %s242, %s256
      %p258 = scmp.eq.s32.totalorder %s38, 0
      %p259 = por %p257, %p258
      %s261 = sadd.s32 %s260, 1
      %p264 = scmp.eq.s32.totalorder %s32, 1
      %p265 = scmp.ne.s32.totalorder %s260, %s262
      %p266 = scmp.eq.s32.totalorder %s32, 0
      %p267 = por %p265, %p266
      %p268 = scmp.ne.s32.totalorder %s260, %s262
      %p269 = scmp.eq.s32.totalorder %s37, 1
      %p270 = por %p268, %p269
      %p271 = scmp.ne.s32.totalorder %s262, %s263
      %p272 = scmp.eq.s32.totalorder %s37, 0
      %p273 = por %p271, %p272
      %p274 = scmp.ne.s32.totalorder %s262, %s263
      %p275 = scmp.eq.s32.totalorder %s38, 1
      %p276 = por %p274, %p275
      %p278 = scmp.ne.s32.totalorder %s263, %s277
      %p279 = scmp.eq.s32.totalorder %s38, 0
      %p280 = por %p278, %p279
      %s282 = sadd.s32 %s281, 1
      %p285 = scmp.eq.s32.totalorder %s32, 1
      %p286 = scmp.ne.s32.totalorder %s281, %s283
      %p287 = scmp.eq.s32.totalorder %s32, 0
      %p288 = por %p286, %p287
      %p289 = scmp.ne.s32.totalorder %s281, %s283
      %p290 = scmp.eq.s32.totalorder %s37, 1
      %p291 = por %p289, %p290
      %p292 = scmp.ne.s32.totalorder %s283, %s284
      %p293 = scmp.eq.s32.totalorder %s37, 0
      %p294 = por %p292, %p293
      %p295 = scmp.ne.s32.totalorder %s283, %s284
      %p296 = scmp.eq.s32.totalorder %s38, 1
      %p297 = por %p295, %p296
      %p299 = scmp.ne.s32.totalorder %s284, %s298
      %p300 = scmp.eq.s32.totalorder %s38, 0
      %p301 = por %p299, %p300
      %s303 = sadd.s32 %s302, 1
      %p306 = scmp.eq.s32.totalorder %s32, 1
      %p307 = scmp.ne.s32.totalorder %s302, %s304
      %p308 = scmp.eq.s32.totalorder %s32, 0
      %p309 = por %p307, %p308
      %p310 = scmp.ne.s32.totalorder %s302, %s304
      %p311 = scmp.eq.s32.totalorder %s37, 1
      %p312 = por %p310, %p311
      %p313 = scmp.ne.s32.totalorder %s304, %s305
      %p314 = scmp.eq.s32.totalorder %s37, 0
      %p315 = por %p313, %p314
      %p316 = scmp.ne.s32.totalorder %s304, %s305
      %p317 = scmp.eq.s32.totalorder %s38, 1
      %p318 = por %p316, %p317
      %p320 = scmp.ne.s32.totalorder %s305, %s319
      %p321 = scmp.eq.s32.totalorder %s38, 0
      %p322 = por %p320, %p321
      %s324 = sadd.s32 %s323, 1
      %p327 = scmp.eq.s32.totalorder %s32, 1
      %p328 = scmp.ne.s32.totalorder %s323, %s325
      %p329 = scmp.eq.s32.totalorder %s32, 0
      %p330 = por %p328, %p329
      %p331 = scmp.ne.s32.totalorder %s323, %s325
      %p332 = scmp.eq.s32.totalorder %s37, 1
      %p333 = por %p331, %p332
      %p334 = scmp.ne.s32.totalorder %s325, %s326
      %p335 = scmp.eq.s32.totalorder %s37, 0
      %p336 = por %p334, %p335
      %p337 = scmp.ne.s32.totalorder %s325, %s326
      %p338 = scmp.eq.s32.totalorder %s38, 1
      %p339 = por %p337, %p338
      %p341 = scmp.ne.s32.totalorder %s326, %s340
      %p342 = scmp.eq.s32.totalorder %s38, 0
      %p343 = por %p341, %p342
      %s345 = sadd.s32 %s344, 1
      %p348 = scmp.eq.s32.totalorder %s32, 1
      %p349 = scmp.ne.s32.totalorder %s344, %s346
      %p350 = scmp.eq.s32.totalorder %s32, 0
      %p351 = por %p349, %p350
      %p352 = scmp.ne.s32.totalorder %s344, %s346
      %p353 = scmp.eq.s32.totalorder %s37, 1
      %p354 = por %p352, %p353
      %p355 = scmp.ne.s32.totalorder %s346, %s347
      %p356 = scmp.eq.s32.totalorder %s37, 0
      %p357 = por %p355, %p356
      %p358 = scmp.ne.s32.totalorder %s346, %s347
      %p359 = scmp.eq.s32.totalorder %s38, 1
      %p360 = por %p358, %p359
      %p362 = scmp.ne.s32.totalorder %s347, %s361
      %p363 = scmp.eq.s32.totalorder %s38, 0
      %p364 = por %p362, %p363
      %s366 = sadd.s32 %s365, 1
      %p369 = scmp.eq.s32.totalorder %s32, 1
      %p370 = scmp.ne.s32.totalorder %s365, %s367
      %p371 = scmp.eq.s32.totalorder %s32, 0
      %p372 = por %p370, %p371
      %p373 = scmp.ne.s32.totalorder %s365, %s367
      %p374 = scmp.eq.s32.totalorder %s37, 1
      %p375 = por %p373, %p374
      %p376 = scmp.ne.s32.totalorder %s367, %s368
      %p377 = scmp.eq.s32.totalorder %s37, 0
      %p378 = por %p376, %p377
      %p379 = scmp.ne.s32.totalorder %s367, %s368
      %p380 = scmp.eq.s32.totalorder %s38, 1
      %p381 = por %p379, %p380
      %p383 = scmp.ne.s32.totalorder %s368, %s382
      %p384 = scmp.eq.s32.totalorder %s38, 0
      %p385 = por %p383, %p384
      %s386 = ssub.s32 %s32, %s39
      %p387 = scmp.eq.s32.totalorder %s386, 0
      %s389 = sadd.s32 %s388, 1
      %s390 = scalar_select %p387, %s388, %s389
      %p393 = pneg %p387
      %p394 = scmp.eq.s32.totalorder %s32, 1
      %p395 = por %p393, %p394
      %p396 = scmp.ne.s32.totalorder %s388, %s391
      %p397 = scmp.eq.s32.totalorder %s32, 0
      %p398 = por %p396, %p397
      %p399 = scmp.ne.s32.totalorder %s388, %s391
      %p400 = scmp.eq.s32.totalorder %s37, 1
      %p401 = por %p399, %p400
      %p402 = scmp.ne.s32.totalorder %s391, %s392
      %p403 = scmp.eq.s32.totalorder %s37, 0
      %p404 = por %p402, %p403
      %p405 = scmp.ne.s32.totalorder %s391, %s392
      %p406 = scmp.eq.s32.totalorder %s38, 1
      %p407 = por %p405, %p406
      %p409 = scmp.ne.s32.totalorder %s392, %s408
      %p410 = scmp.eq.s32.totalorder %s38, 0
      %p411 = por %p409, %p410
      %p412 = scmp.le.s32.totalorder 1, %s32
      %p413 = scmp.lt.s32.totalorder %s32, 3
      %p414 = pnand %p412, %p413
      %p415 = pneg %p414
      // Predicated region
      $region9: #{tpu_custom_call.1} parent=5 // pred_check
        _
      $region10: #{tpu_custom_call.1} parent=5 // pred_check_branch
        %417 = sbr.rel (%p414) target = $region12
      $region11: #{tpu_custom_call.1} parent=5 // pred_region
        %s418 = ssub.s32 %s32, 1
        // Predicated region
        $region13: #{tpu_custom_call.1} parent=11 // pred_check
          %p419 = pneg %p79
        $region14: #{tpu_custom_call.1} parent=11 // pred_check_branch
          %421 = sbr.rel (%p419) target = $region16
        $region15: #{tpu_custom_call.1} parent=11 // pred_region
          %423 = vsyncadd [#allocation6], 0
          %s425 = sshll.u32 %s1, 4
          %s426 = int_to_ptr.hbm [resolvable:$true] %s425
          %s427 = sshll.u32 [#allocation5], 4
          %s428 = int_to_ptr.vmem [resolvable:$true] %s427
          %430 = dma.hbm_to_vmem [thread:$0]  %s426, 128, %s428, [#allocation6]
        $region16: #{tpu_custom_call.1} parent=11 // pred_fallthru
          _
        // Predicated region
        $region17: #{tpu_custom_call.1} parent=11 // pred_check
          %p431 = pneg %p100
        $region18: #{tpu_custom_call.1} parent=11 // pred_check_branch
          %433 = sbr.rel (%p431) target = $region20
        $region19: #{tpu_custom_call.1} parent=11 // pred_region
          %435 = vsyncadd [#allocation6], 0
          %s437 = sshll.u32 %s2, 4
          %s438 = int_to_ptr.hbm [resolvable:$true] %s437
          %s439 = sshll.u32 [#allocation7], 4
          %s440 = int_to_ptr.vmem [resolvable:$true] %s439
          %442 = dma.hbm_to_vmem [thread:$0]  %s438, 128, %s440, [#allocation6]
        $region20: #{tpu_custom_call.1} parent=11 // pred_fallthru
          _
        // Predicated region
        $region21: #{tpu_custom_call.1} parent=11 // pred_check
          %p443 = pneg %p147
        $region22: #{tpu_custom_call.1} parent=11 // pred_check_branch
          %445 = sbr.rel (%p443) target = $region24
        $region23: #{tpu_custom_call.1} parent=11 // pred_region
          %447 = vsyncadd [#allocation9], 0
          %s448 = sshll.u32 %s4, 4
          %s449 = int_to_ptr.hbm [resolvable:$true] %s448
          %s450 = sshll.u32 [#allocation8], 4
          %s451 = int_to_ptr.vmem [resolvable:$true] %s450
          %456 = dma.hbm_to_vmem [thread:$0]  %s449, 512, %s451, [#allocation9], 64, 64, 4
        $region24: #{tpu_custom_call.1} parent=11 // pred_fallthru
          _
        // Predicated region
        $region25: #{tpu_custom_call.1} parent=11 // pred_check
          %p457 = pneg %p168
        $region26: #{tpu_custom_call.1} parent=11 // pred_check_branch
          %459 = sbr.rel (%p457) target = $region28
        $region27: #{tpu_custom_call.1} parent=11 // pred_region
          _
        $region28: #{tpu_custom_call.1} parent=11 // pred_fallthru
          _
        // Predicated region
        $region29: #{tpu_custom_call.1} parent=11 // pred_check
          %p460 = pneg %p189
        $region30: #{tpu_custom_call.1} parent=11 // pred_check_branch
          %462 = sbr.rel (%p460) target = $region32
        $region31: #{tpu_custom_call.1} parent=11 // pred_region
          %464 = vsyncadd [#allocation9], 0
          %s465 = sshll.u32 %s6, 4
          %s466 = int_to_ptr.hbm [resolvable:$true] %s465
          %s467 = sshll.u32 [#allocation10], 4
          %s468 = int_to_ptr.vmem [resolvable:$true] %s467
          %473 = dma.hbm_to_vmem [thread:$0]  %s466, 512, %s468, [#allocation9], 64, 64, 4
        $region32: #{tpu_custom_call.1} parent=11 // pred_fallthru
          _
        // Predicated region
        $region33: #{tpu_custom_call.1} parent=11 // pred_check
          %p474 = pneg %p210
        $region34: #{tpu_custom_call.1} parent=11 // pred_check_branch
          %476 = sbr.rel (%p474) target = $region36
        $region35: #{tpu_custom_call.1} parent=11 // pred_region
          _
        $region36: #{tpu_custom_call.1} parent=11 // pred_fallthru
          _
        // Predicated region
        $region37: #{tpu_custom_call.1} parent=11 // pred_check
          %p477 = pneg %p231
        $region38: #{tpu_custom_call.1} parent=11 // pred_check_branch
          %479 = sbr.rel (%p477) target = $region40
        $region39: #{tpu_custom_call.1} parent=11 // pred_region
          %481 = vsyncadd [#allocation12], 0
          %s482 = sshll.u32 %s8, 4
          %s483 = int_to_ptr.hbm [resolvable:$true] %s482
          %s484 = sshll.u32 [#allocation11], 4
          %s485 = int_to_ptr.vmem [resolvable:$true] %s484
          %490 = dma.hbm_to_vmem [thread:$0]  %s483, 32, %s485, [#allocation12], 16, 16, 1
        $region40: #{tpu_custom_call.1} parent=11 // pred_fallthru
          _
        // Predicated region
        $region41: #{tpu_custom_call.1} parent=11 // pred_check
          %p491 = pneg %p252
        $region42: #{tpu_custom_call.1} parent=11 // pred_check_branch
          %493 = sbr.rel (%p491) target = $region44
        $region43: #{tpu_custom_call.1} parent=11 // pred_region
          _
        $region44: #{tpu_custom_call.1} parent=11 // pred_fallthru
          _
        // Predicated region
        $region45: #{tpu_custom_call.1} parent=11 // pred_check
          %p494 = pneg %p273
        $region46: #{tpu_custom_call.1} parent=11 // pred_check_branch
          %496 = sbr.rel (%p494) target = $region48
        $region47: #{tpu_custom_call.1} parent=11 // pred_region
          %498 = vsyncadd [#allocation12], 0
          %s499 = sshll.u32 %s10, 4
          %s500 = int_to_ptr.hbm [resolvable:$true] %s499
          %s501 = sshll.u32 [#allocation13], 4
          %s502 = int_to_ptr.vmem [resolvable:$true] %s501
          %507 = dma.hbm_to_vmem [thread:$0]  %s500, 512, %s502, [#allocation12], 64, 64, 4
        $region48: #{tpu_custom_call.1} parent=11 // pred_fallthru
          _
        // Predicated region
        $region49: #{tpu_custom_call.1} parent=11 // pred_check
          %p508 = pneg %p294
        $region50: #{tpu_custom_call.1} parent=11 // pred_check_branch
          %510 = sbr.rel (%p508) target = $region52
        $region51: #{tpu_custom_call.1} parent=11 // pred_region
          _
        $region52: #{tpu_custom_call.1} parent=11 // pred_fallthru
          _
        // Predicated region
        $region53: #{tpu_custom_call.1} parent=11 // pred_check
          %p511 = pneg %p315
        $region54: #{tpu_custom_call.1} parent=11 // pred_check_branch
          %513 = sbr.rel (%p511) target = $region56
        $region55: #{tpu_custom_call.1} parent=11 // pred_region
          %515 = vsyncadd [#allocation15], 0
          %s516 = sshll.u32 %s12, 4
          %s517 = int_to_ptr.hbm [resolvable:$true] %s516
          %s518 = sshll.u32 [#allocation14], 4
          %s519 = int_to_ptr.vmem [resolvable:$true] %s518
          %524 = dma.hbm_to_vmem [thread:$0]  %s517, 512, %s519, [#allocation15], 64, 64, 4
        $region56: #{tpu_custom_call.1} parent=11 // pred_fallthru
          _
        // Predicated region
        $region57: #{tpu_custom_call.1} parent=11 // pred_check
          %p525 = pneg %p336
        $region58: #{tpu_custom_call.1} parent=11 // pred_check_branch
          %527 = sbr.rel (%p525) target = $region60
        $region59: #{tpu_custom_call.1} parent=11 // pred_region
          _
        $region60: #{tpu_custom_call.1} parent=11 // pred_fallthru
          _
        // Predicated region
        $region61: #{tpu_custom_call.1} parent=11 // pred_check
          %p528 = pneg %p357
        $region62: #{tpu_custom_call.1} parent=11 // pred_check_branch
          %530 = sbr.rel (%p528) target = $region64
        $region63: #{tpu_custom_call.1} parent=11 // pred_region
          %532 = vsyncadd [#allocation15], 0
          %s533 = sshll.u32 %s14, 4
          %s534 = int_to_ptr.hbm [resolvable:$true] %s533
          %s535 = sshll.u32 [#allocation16], 4
          %s536 = int_to_ptr.vmem [resolvable:$true] %s535
          %541 = dma.hbm_to_vmem [thread:$0]  %s534, 32, %s536, [#allocation15], 16, 16, 1
        $region64: #{tpu_custom_call.1} parent=11 // pred_fallthru
          _
        // Predicated region
        $region65: #{tpu_custom_call.1} parent=11 // pred_check
          %p542 = pneg %p378
        $region66: #{tpu_custom_call.1} parent=11 // pred_check_branch
          %544 = sbr.rel (%p542) target = $region68
        $region67: #{tpu_custom_call.1} parent=11 // pred_region
          _
        $region68: #{tpu_custom_call.1} parent=11 // pred_fallthru
          _
      $region12: #{tpu_custom_call.1} parent=5 // pred_fallthru
        _
      %p545 = scmp.lt.s32.totalorder %s32, 2
      // Predicated region
      $region69: #{tpu_custom_call.1} parent=5 // pred_check
        %p546 = pneg %p545
      $region70: #{tpu_custom_call.1} parent=5 // pred_check_branch
        %548 = sbr.rel (%p546) target = $region72
      $region71: #{tpu_custom_call.1} parent=5 // pred_region
        // Predicated region
        $region73: #{tpu_custom_call.1} parent=71 // pred_check
          %p549 = pneg %p52
        $region74: #{tpu_custom_call.1} parent=71 // pred_check_branch
          %551 = sbr.rel (%p549) target = $region76
        $region75: #{tpu_custom_call.1} parent=71 // pred_region
          %s552 = sand.u32 %s42, 1
          %s553 = scalar_lea.sflag [#allocation3], %s552
          %s554 = sand.u32 %s42, 1
          %s555 = smul.addr %s554, 8
          %s556 = scalar_lea.vmem [#allocation2], %s555
          %558 = vsyncadd %s553, 0
          %s559 = smul.addr %s32, 8
          %s560 = scalar_lea.hbm %s0, %s559
          %s562 = sshll.u32 %s560, 4
          %s563 = int_to_ptr.hbm [resolvable:$true] %s562
          %s564 = sshll.u32 %s556, 4
          %s565 = int_to_ptr.vmem [resolvable:$true] %s564
          %567 = dma.hbm_to_vmem [thread:$0]  %s563, 128, %s565, %s553
        $region76: #{tpu_custom_call.1} parent=71 // pred_fallthru
          _
        // Predicated region
        $region77: #{tpu_custom_call.1} parent=71 // pred_check
          %p568 = pneg %p120
        $region78: #{tpu_custom_call.1} parent=71 // pred_check_branch
          %570 = sbr.rel (%p568) target = $region80
        $region79: #{tpu_custom_call.1} parent=71 // pred_region
          %p571 = scmp.lt.s32.totalorder %s32, 1
          %s572 = scalar_select %p571, %s32, 1
          %s573 = scalar_lea.vmem %s3, %s572
        $region80: #{tpu_custom_call.1} parent=71 // pred_fallthru
          _
      $region72: #{tpu_custom_call.1} parent=5 // pred_fallthru
        _
      %p574 = scmp.le.s32.totalorder 1, %s32
      %p575 = scmp.lt.s32.totalorder %s32, 3
      %p576 = pnand %p574, %p575
      %p577 = pneg %p576
      // Predicated region
      $region81: #{tpu_custom_call.1} parent=5 // pred_check
        _
      $region82: #{tpu_custom_call.1} parent=5 // pred_check_branch
        %579 = sbr.rel (%p576) target = $region84
      $region83: #{tpu_custom_call.1} parent=5 // pred_region
        %s580 = ssub.s32 %s32, 1
        %s581 = sand.u32 %s45, 1
        %s582 = scalar_lea.sflag [#allocation3], %s581
        %s583 = sand.u32 %s45, 1
        %s584 = smul.addr %s583, 8
        %s585 = scalar_lea.vmem [#allocation2], %s584
        // Predicated region
        $region85: #{tpu_custom_call.1} parent=83 // pred_check
          %p586 = pneg %p58
        $region86: #{tpu_custom_call.1} parent=83 // pred_check_branch
          %588 = sbr.rel (%p586) target = $region88
        $region87: #{tpu_custom_call.1} parent=83 // pred_region
          %590 = dma.done %s582, 128
        $region88: #{tpu_custom_call.1} parent=83 // pred_fallthru
          _
        // Predicated region
        $region89: #{tpu_custom_call.1} parent=83 // pred_check
          %p591 = pneg %p79
        $region90: #{tpu_custom_call.1} parent=83 // pred_check_branch
          %593 = sbr.rel (%p591) target = $region92
        $region91: #{tpu_custom_call.1} parent=83 // pred_region
          %595 = dma.done [#allocation6], 128
        $region92: #{tpu_custom_call.1} parent=83 // pred_fallthru
          _
        // Predicated region
        $region93: #{tpu_custom_call.1} parent=83 // pred_check
          %p596 = pneg %p100
        $region94: #{tpu_custom_call.1} parent=83 // pred_check_branch
          %598 = sbr.rel (%p596) target = $region96
        $region95: #{tpu_custom_call.1} parent=83 // pred_region
          %600 = dma.done [#allocation6], 128
        $region96: #{tpu_custom_call.1} parent=83 // pred_fallthru
          _
        // Predicated region
        $region97: #{tpu_custom_call.1} parent=83 // pred_check
          %p601 = pneg %p147
        $region98: #{tpu_custom_call.1} parent=83 // pred_check_branch
          %603 = sbr.rel (%p601) target = $region100
        $region99: #{tpu_custom_call.1} parent=83 // pred_region
          %605 = dma.done [#allocation9], 512
        $region100: #{tpu_custom_call.1} parent=83 // pred_fallthru
          _
        // Predicated region
        $region101: #{tpu_custom_call.1} parent=83 // pred_check
          %p606 = pneg %p189
        $region102: #{tpu_custom_call.1} parent=83 // pred_check_branch
          %608 = sbr.rel (%p606) target = $region104
        $region103: #{tpu_custom_call.1} parent=83 // pred_region
          %610 = dma.done [#allocation9], 512
        $region104: #{tpu_custom_call.1} parent=83 // pred_fallthru
          _
        // Predicated region
        $region105: #{tpu_custom_call.1} parent=83 // pred_check
          %p611 = pneg %p231
        $region106: #{tpu_custom_call.1} parent=83 // pred_check_branch
          %613 = sbr.rel (%p611) target = $region108
        $region107: #{tpu_custom_call.1} parent=83 // pred_region
          %615 = dma.done [#allocation12], 32
        $region108: #{tpu_custom_call.1} parent=83 // pred_fallthru
          _
        // Predicated region
        $region109: #{tpu_custom_call.1} parent=83 // pred_check
          %p616 = pneg %p273
        $region110: #{tpu_custom_call.1} parent=83 // pred_check_branch
          %618 = sbr.rel (%p616) target = $region112
        $region111: #{tpu_custom_call.1} parent=83 // pred_region
          %620 = dma.done [#allocation12], 512
        $region112: #{tpu_custom_call.1} parent=83 // pred_fallthru
          _
        // Predicated region
        $region113: #{tpu_custom_call.1} parent=83 // pred_check
          %p621 = pneg %p315
        $region114: #{tpu_custom_call.1} parent=83 // pred_check_branch
          %623 = sbr.rel (%p621) target = $region116
        $region115: #{tpu_custom_call.1} parent=83 // pred_region
          %625 = dma.done [#allocation15], 512
        $region116: #{tpu_custom_call.1} parent=83 // pred_fallthru
          _
        // Predicated region
        $region117: #{tpu_custom_call.1} parent=83 // pred_check
          %p626 = pneg %p357
        $region118: #{tpu_custom_call.1} parent=83 // pred_check_branch
          %628 = sbr.rel (%p626) target = $region120
        $region119: #{tpu_custom_call.1} parent=83 // pred_region
          %630 = dma.done [#allocation15], 32
        $region120: #{tpu_custom_call.1} parent=83 // pred_fallthru
          _
        %s631 = sand.u32 %s45, 1
        %s632 = scalar_lea.sflag [#allocation3], %s631
        %s633 = sand.u32 %s45, 1
        %s634 = smul.addr %s633, 8
        %s635 = scalar_lea.vmem [#allocation2], %s634
        %p636 = pneg %p58
        %p637 = pneg %p55
        %p638 = pneg %p79
        %p639 = pneg %p76
        %p640 = pneg %p100
        %p641 = pneg %p97
        %p642 = scmp.lt.s32.totalorder %s37, 1
        %s643 = scalar_select %p642, %s37, 1
        %s644 = scalar_lea.vmem %s3, %s643
        %p645 = pneg %p126
        %p646 = pneg %p123
        %p647 = pneg %p147
        %p648 = pneg %p144
        %p649 = pneg %p168
        %p650 = pneg %p165
        %p651 = pneg %p189
        %p652 = pneg %p186
        %p653 = pneg %p210
        %p654 = pneg %p207
        %p655 = pneg %p231
        %p656 = pneg %p228
        %p657 = pneg %p252
        %p658 = pneg %p249
        %p659 = pneg %p273
        %p660 = pneg %p270
        %p661 = pneg %p294
        %p662 = pneg %p291
        %p663 = pneg %p315
        %p664 = pneg %p312
        %p665 = pneg %p336
        %p666 = pneg %p333
        %p667 = pneg %p357
        %p668 = pneg %p354
        %p669 = pneg %p378
        %p670 = pneg %p375
        %p671 = pneg %p404
        %p672 = pneg %p401
        %s673 = sand.u32 %s391, 1
        %s674 = scalar_lea.sflag [#allocation4], %s673
        %s675 = sand.u32 %s391, 1
        %s676 = smul.addr %s675, 8
        %s677 = scalar_lea.vmem [#allocation17], %s676
        %p678 = scmp.lt.s32.totalorder %s37, 1
        %s679 = scalar_select %p678, %s37, 1
        %s680 = scalar_lea.vmem %s3, %s679
        %v682 = vld [vmem:[%s585] sm:$0xff]
        %v683 = vld [vmem:[#allocation5] sm:$0xff]
        %v684 = vld [vmem:[#allocation7] sm:$0xff]
        %v685 = vmul.f32 %v682, %v683
        %687 = vrot.lane.b32.xlu0 %v684, 16
        %v688 = vpop.permute.xlu0 %687
        %v690 = vmul.f32 %v682, %v688
        %692 = vrot.lane.b32.xlu0 %v690, 112
        %v693 = vpop.permute.xlu0 %692
        %v695 = vsub.f32 %v685, %v693
        %697 = vrot.lane.b32.xlu0 %v683, 16
        %v698 = vpop.permute.xlu0 %697
        %v700 = vmul.f32 %v682, %v698
        %v701 = vmul.f32 %v682, %v684
        %703 = vrot.lane.b32.xlu0 %v701, 16
        %v704 = vpop.permute.xlu0 %703
        %v706 = vadd.f32 %v700, %v704
        %vm707 = vcmask 130048
        %v708 = vsel %vm707, %v695, %v706
        %v709 = vld [vmem:[%s680] sm:$0x1]
        %vm710 = vcmp.gt.f32.partialorder %v709, 0.5
        %v711 = vpack.c.bf16 %v708, %v708
        %v712 = vld [vmem:[#allocation8] sm:$0xf]
        %v713 = vld [vmem:[#allocation8 + $0x4] sm:$0xf]
        %v714 = vld [vmem:[#allocation8 + $0x8] sm:$0xf]
        %v715 = vld [vmem:[#allocation8 + $0xc] sm:$0xf]
        %v716 = vld [vmem:[%s5] sm:$0x1]
        %v718 = vperm.slane %v716, 0
        %v724 = vunpack.c.l.b16 %v712
        %v725 = vunpack.c.l.b16 %v713
        %v726 = vunpack.c.l.b16 %v714
        %v727 = vunpack.c.l.b16 %v715
        %v728 = vpack.c.b16 %v725, %v724
        %v729 = vpack.c.b16 %v727, %v726
        %vm732 = vcmask 261120
        %v734 = vsel %vm732, %v711, 0
        %736 = vmatpush.bf16.msra.mxu0 0
        %737 = vmatpush.bf16.msra.mxu0 0
        %738 = vmatpush.bf16.msra.mxu0 0
        %739 = vmatpush.bf16.msra.mxu0 0
        %740 = vmatpush.bf16.msra.mxu0 0
        %741 = vmatpush.bf16.msra.mxu0 0
        %742 = vmatpush.bf16.msra.mxu0 %v729
        %743 = vmatpush.bf16.msra.mxu0 %v728
        %744 = vmatmul.bf16.gmra.mxu0 %v734
        %v745 = vpop.f32.mrf.mxu0
        %v746 = vadd.f32 %v718, %v745
        %v747 = vpop.f32.mrf.mxu0
        %748 = vdwg.mxu0
        %750 = vrot.lane.b32.xlu0 %v746, 96
        %v751 = vpop.permute.xlu0 %750
        %vm752 = vcmask 64512
        %v753 = vsel %vm752, %v746, 0
        %v755 = vsel %vm752, %v751, 0
        %757 = vmatpush.xpose.msra.mxu0 0.0
        %758 = vmatpush.xpose.msra.mxu0 0.0
        %759 = vmatpush.xpose.msra.mxu0 0.0
        %760 = vmatpush.xpose.msra.mxu0 0.0
        %761 = vmatpush.xpose.msra.mxu0 0.0
        %762 = vmatpush.xpose.msra.mxu0 0.0
        %763 = vmatpush.xpose.msra.mxu0 0.0
        %764 = vmatpush.xpose.msra.mxu0 0.0
        %765 = vmatpush.xpose.msra.mxu0 0.0
        %766 = vmatpush.xpose.msra.mxu0 0.0
        %767 = vmatpush.xpose.msra.mxu0 0.0
        %768 = vmatpush.xpose.msra.mxu0 0.0
        %769 = vmatpush.xpose.msra.mxu0 0.0
        %770 = vmatpush.xpose.msra.mxu0 0.0
        %771 = vmatpush.xpose.msra.mxu0 0.0
        %772 = vmatpush.xpose.msra.mxu0 %v755
        %773 = vmatmul.f32.gmra.mxu0 %v753
        %v774 = vpop.f32.mrf.mxu0
        %v775 = vadd.f32 0.0, %v774
        %776 = vdwg.mxu0
        %v777 = vmul.f32 %v775, 0.35355338
        %v778 = vsel %vm710, 1, 0
        %v779 = vperm.slane %v778, 0
        %vm780 = vcmp.eq.s32.totalorder %v779, 1
        %v781 = vsel %vm780, %v777, -1e+09
        %v782 = vsel %vm752, %v781, -inf
        %783 = vmax.xlane.f32.xlu0 %v782
        %v784 = vpop.xlane.xlu0 %783
        %v785 = vsub.f32 %v781, %v784
        %v786 = vmul.f32 %v785, 1.442695
        %v787 = vpow.pop %v786
        %v788 = vsel %vm752, %v787, 0.0
        %789 = vadd.xlane.f32.xlu0 %v788
        %v790 = vpop.xlane.xlu0 %789
        %v791 = vrcp.pop %v790
        %v792 = vmul.f32 %v790, %v791
        %v793 = vsub.f32 1.0, %v792
        %v794 = vmul.f32 %v791, %v793
        %v795 = vadd.f32 %v791, %v794
        %vm796 = vweird.f32 %v790
        %vm797 = vweird.f32 %v791
        %vm798 = vmor %vm796, %vm797
        %v799 = vsel %vm798, %v791, %v795
        %v800 = vand.u32 2147483647, %v790
        %vm801 = vcmp.eq.f32.partialorder %v800, 8.507059e+37
        %v802 = vand.u32 %v790, 2147483648
        %v803 = vor.u32 1.1754944e-38, %v802
        %v804 = vsel %vm801, %v803, %v799
        %v805 = vmul.f32 %v787, %v804
        %806 = vrot.lane.b32.xlu0 %v746, 64
        %v807 = vpop.permute.xlu0 %806
        %v810 = vsel %vm752, %v805, 0
        %812 = vmatpush.msra.mxu0 0.0
        %813 = vmatpush.msra.mxu0 0.0
        %814 = vmatpush.msra.mxu0 0.0
        %815 = vmatpush.msra.mxu0 0.0
        %816 = vmatpush.msra.mxu0 0.0
        %817 = vmatpush.msra.mxu0 0.0
        %818 = vmatpush.msra.mxu0 0.0
        %819 = vmatpush.msra.mxu0 0.0
        %820 = vmatpush.msra.mxu0 0.0
        %821 = vmatpush.msra.mxu0 0.0
        %822 = vmatpush.msra.mxu0 0.0
        %823 = vmatpush.msra.mxu0 0.0
        %824 = vmatpush.msra.mxu0 0.0
        %825 = vmatpush.msra.mxu0 0.0
        %826 = vmatpush.msra.mxu0 0.0
        %827 = vmatpush.msra.mxu0 %v807
        %828 = vmatmul.f32.gmra.mxu0 %v810
        %v829 = vpop.f32.mrf.mxu0
        %v830 = vadd.f32 0.0, %v829
        %831 = vdwg.mxu0
        %832 = vrot.lane.b32.xlu0 %v746, 120
        %v833 = vpop.permute.xlu0 %832
        %834 = vrot.lane.b32.xlu0 %v746, 88
        %v835 = vpop.permute.xlu0 %834
        %v836 = vsel %vm752, %v833, 0
        %v838 = vsel %vm752, %v835, 0
        %840 = vmatpush.xpose.msra.mxu0 0.0
        %841 = vmatpush.xpose.msra.mxu0 0.0
        %842 = vmatpush.xpose.msra.mxu0 0.0
        %843 = vmatpush.xpose.msra.mxu0 0.0
        %844 = vmatpush.xpose.msra.mxu0 0.0
        %845 = vmatpush.xpose.msra.mxu0 0.0
        %846 = vmatpush.xpose.msra.mxu0 0.0
        %847 = vmatpush.xpose.msra.mxu0 0.0
        %848 = vmatpush.xpose.msra.mxu0 0.0
        %849 = vmatpush.xpose.msra.mxu0 0.0
        %850 = vmatpush.xpose.msra.mxu0 0.0
        %851 = vmatpush.xpose.msra.mxu0 0.0
        %852 = vmatpush.xpose.msra.mxu0 0.0
        %853 = vmatpush.xpose.msra.mxu0 0.0
        %854 = vmatpush.xpose.msra.mxu0 0.0
        %855 = vmatpush.xpose.msra.mxu0 %v838
        %856 = vmatmul.f32.gmra.mxu0 %v836
        %v857 = vpop.f32.mrf.mxu0
        %v858 = vadd.f32 0.0, %v857
        %859 = vdwg.mxu0
        %v860 = vmul.f32 %v858, 0.35355338
        %v861 = vsel %vm780, %v860, -1e+09
        %v862 = vsel %vm752, %v861, -inf
        %863 = vmax.xlane.f32.xlu0 %v862
        %v864 = vpop.xlane.xlu0 %863
        %v865 = vsub.f32 %v861, %v864
        %v866 = vmul.f32 %v865, 1.442695
        %v867 = vpow.pop %v866
        %v868 = vsel %vm752, %v867, 0.0
        %869 = vadd.xlane.f32.xlu0 %v868
        %v870 = vpop.xlane.xlu0 %869
        %v871 = vrcp.pop %v870
        %v872 = vmul.f32 %v870, %v871
        %v873 = vsub.f32 1.0, %v872
        %v874 = vmul.f32 %v871, %v873
        %v875 = vadd.f32 %v871, %v874
        %vm876 = vweird.f32 %v870
        %vm877 = vweird.f32 %v871
        %vm878 = vmor %vm876, %vm877
        %v879 = vsel %vm878, %v871, %v875
        %v880 = vand.u32 2147483647, %v870
        %vm881 = vcmp.eq.f32.partialorder %v880, 8.507059e+37
        %v882 = vand.u32 %v870, 2147483648
        %v883 = vor.u32 1.1754944e-38, %v882
        %v884 = vsel %vm881, %v883, %v879
        %v885 = vmul.f32 %v867, %v884
        %886 = vrot.lane.b32.xlu0 %v746, 56
        %v887 = vpop.permute.xlu0 %886
        %v890 = vsel %vm752, %v885, 0
        %892 = vmatpush.msra.mxu0 0.0
        %893 = vmatpush.msra.mxu0 0.0
        %894 = vmatpush.msra.mxu0 0.0
        %895 = vmatpush.msra.mxu0 0.0
        %896 = vmatpush.msra.mxu0 0.0
        %897 = vmatpush.msra.mxu0 0.0
        %898 = vmatpush.msra.mxu0 0.0
        %899 = vmatpush.msra.mxu0 0.0
        %900 = vmatpush.msra.mxu0 0.0
        %901 = vmatpush.msra.mxu0 0.0
        %902 = vmatpush.msra.mxu0 0.0
        %903 = vmatpush.msra.mxu0 0.0
        %904 = vmatpush.msra.mxu0 0.0
        %905 = vmatpush.msra.mxu0 0.0
        %906 = vmatpush.msra.mxu0 0.0
        %907 = vmatpush.msra.mxu0 %v887
        %908 = vmatmul.f32.gmra.mxu0 %v890
        %v909 = vpop.f32.mrf.mxu0
        %v910 = vadd.f32 0.0, %v909
        %911 = vdwg.mxu0
        %912 = vrot.lane.b32.xlu0 %v746, 112
        %v913 = vpop.permute.xlu0 %912
        %914 = vrot.lane.b32.xlu0 %v746, 80
        %v915 = vpop.permute.xlu0 %914
        %v916 = vsel %vm752, %v913, 0
        %v918 = vsel %vm752, %v915, 0
        %920 = vmatpush.xpose.msra.mxu0 0.0
        %921 = vmatpush.xpose.msra.mxu0 0.0
        %922 = vmatpush.xpose.msra.mxu0 0.0
        %923 = vmatpush.xpose.msra.mxu0 0.0
        %924 = vmatpush.xpose.msra.mxu0 0.0
        %925 = vmatpush.xpose.msra.mxu0 0.0
        %926 = vmatpush.xpose.msra.mxu0 0.0
        %927 = vmatpush.xpose.msra.mxu0 0.0
        %928 = vmatpush.xpose.msra.mxu0 0.0
        %929 = vmatpush.xpose.msra.mxu0 0.0
        %930 = vmatpush.xpose.msra.mxu0 0.0
        %931 = vmatpush.xpose.msra.mxu0 0.0
        %932 = vmatpush.xpose.msra.mxu0 0.0
        %933 = vmatpush.xpose.msra.mxu0 0.0
        %934 = vmatpush.xpose.msra.mxu0 0.0
        %935 = vmatpush.xpose.msra.mxu0 %v918
        %936 = vmatmul.f32.gmra.mxu0 %v916
        %v937 = vpop.f32.mrf.mxu0
        %v938 = vadd.f32 0.0, %v937
        %939 = vdwg.mxu0
        %v940 = vmul.f32 %v938, 0.35355338
        %v941 = vsel %vm780, %v940, -1e+09
        %v942 = vsel %vm752, %v941, -inf
        %943 = vmax.xlane.f32.xlu0 %v942
        %v944 = vpop.xlane.xlu0 %943
        %v945 = vsub.f32 %v941, %v944
        %v946 = vmul.f32 %v945, 1.442695
        %v947 = vpow.pop %v946
        %v948 = vsel %vm752, %v947, 0.0
        %949 = vadd.xlane.f32.xlu0 %v948
        %v950 = vpop.xlane.xlu0 %949
        %v951 = vrcp.pop %v950
        %v952 = vmul.f32 %v950, %v951
        %v953 = vsub.f32 1.0, %v952
        %v954 = vmul.f32 %v951, %v953
        %v955 = vadd.f32 %v951, %v954
        %vm956 = vweird.f32 %v950
        %vm957 = vweird.f32 %v951
        %vm958 = vmor %vm956, %vm957
        %v959 = vsel %vm958, %v951, %v955
        %v960 = vand.u32 2147483647, %v950
        %vm961 = vcmp.eq.f32.partialorder %v960, 8.507059e+37
        %v962 = vand.u32 %v950, 2147483648
        %v963 = vor.u32 1.1754944e-38, %v962
        %v964 = vsel %vm961, %v963, %v959
        %v965 = vmul.f32 %v947, %v964
        %966 = vrot.lane.b32.xlu0 %v746, 48
        %v967 = vpop.permute.xlu0 %966
        %v970 = vsel %vm752, %v965, 0
        %972 = vmatpush.msra.mxu0 0.0
        %973 = vmatpush.msra.mxu0 0.0
        %974 = vmatpush.msra.mxu0 0.0
        %975 = vmatpush.msra.mxu0 0.0
        %976 = vmatpush.msra.mxu0 0.0
        %977 = vmatpush.msra.mxu0 0.0
        %978 = vmatpush.msra.mxu0 0.0
        %979 = vmatpush.msra.mxu0 0.0
        %980 = vmatpush.msra.mxu0 0.0
        %981 = vmatpush.msra.mxu0 0.0
        %982 = vmatpush.msra.mxu0 0.0
        %983 = vmatpush.msra.mxu0 0.0
        %984 = vmatpush.msra.mxu0 0.0
        %985 = vmatpush.msra.mxu0 0.0
        %986 = vmatpush.msra.mxu0 0.0
        %987 = vmatpush.msra.mxu0 %v967
        %988 = vmatmul.f32.gmra.mxu0 %v970
        %v989 = vpop.f32.mrf.mxu0
        %v990 = vadd.f32 0.0, %v989
        %991 = vdwg.mxu0
        %992 = vrot.lane.b32.xlu0 %v746, 104
        %v993 = vpop.permute.xlu0 %992
        %994 = vrot.lane.b32.xlu0 %v746, 72
        %v995 = vpop.permute.xlu0 %994
        %v996 = vsel %vm752, %v993, 0
        %v998 = vsel %vm752, %v995, 0
        %1000 = vmatpush.xpose.msra.mxu0 0.0
        %1001 = vmatpush.xpose.msra.mxu0 0.0
        %1002 = vmatpush.xpose.msra.mxu0 0.0
        %1003 = vmatpush.xpose.msra.mxu0 0.0
        %1004 = vmatpush.xpose.msra.mxu0 0.0
        %1005 = vmatpush.xpose.msra.mxu0 0.0
        %1006 = vmatpush.xpose.msra.mxu0 0.0
        %1007 = vmatpush.xpose.msra.mxu0 0.0
        %1008 = vmatpush.xpose.msra.mxu0 0.0
        %1009 = vmatpush.xpose.msra.mxu0 0.0
        %1010 = vmatpush.xpose.msra.mxu0 0.0
        %1011 = vmatpush.xpose.msra.mxu0 0.0
        %1012 = vmatpush.xpose.msra.mxu0 0.0
        %1013 = vmatpush.xpose.msra.mxu0 0.0
        %1014 = vmatpush.xpose.msra.mxu0 0.0
        %1015 = vmatpush.xpose.msra.mxu0 %v998
        %1016 = vmatmul.f32.gmra.mxu0 %v996
        %v1017 = vpop.f32.mrf.mxu0
        %v1018 = vadd.f32 0.0, %v1017
        %1019 = vdwg.mxu0
        %v1020 = vmul.f32 %v1018, 0.35355338
        %v1021 = vsel %vm780, %v1020, -1e+09
        %v1022 = vsel %vm752, %v1021, -inf
        %1023 = vmax.xlane.f32.xlu0 %v1022
        %v1024 = vpop.xlane.xlu0 %1023
        %v1025 = vsub.f32 %v1021, %v1024
        %v1026 = vmul.f32 %v1025, 1.442695
        %v1027 = vpow.pop %v1026
        %v1028 = vsel %vm752, %v1027, 0.0
        %1029 = vadd.xlane.f32.xlu0 %v1028
        %v1030 = vpop.xlane.xlu0 %1029
        %v1031 = vrcp.pop %v1030
        %v1032 = vmul.f32 %v1030, %v1031
        %v1033 = vsub.f32 1.0, %v1032
        %v1034 = vmul.f32 %v1031, %v1033
        %v1035 = vadd.f32 %v1031, %v1034
        %vm1036 = vweird.f32 %v1030
        %vm1037 = vweird.f32 %v1031
        %vm1038 = vmor %vm1036, %vm1037
        %v1039 = vsel %vm1038, %v1031, %v1035
        %v1040 = vand.u32 2147483647, %v1030
        %vm1041 = vcmp.eq.f32.partialorder %v1040, 8.507059e+37
        %v1042 = vand.u32 %v1030, 2147483648
        %v1043 = vor.u32 1.1754944e-38, %v1042
        %v1044 = vsel %vm1041, %v1043, %v1039
        %v1045 = vmul.f32 %v1027, %v1044
        %1046 = vrot.lane.b32.xlu0 %v746, 40
        %v1047 = vpop.permute.xlu0 %1046
        %v1050 = vsel %vm752, %v1045, 0
        %1052 = vmatpush.msra.mxu0 0.0
        %1053 = vmatpush.msra.mxu0 0.0
        %1054 = vmatpush.msra.mxu0 0.0
        %1055 = vmatpush.msra.mxu0 0.0
        %1056 = vmatpush.msra.mxu0 0.0
        %1057 = vmatpush.msra.mxu0 0.0
        %1058 = vmatpush.msra.mxu0 0.0
        %1059 = vmatpush.msra.mxu0 0.0
        %1060 = vmatpush.msra.mxu0 0.0
        %1061 = vmatpush.msra.mxu0 0.0
        %1062 = vmatpush.msra.mxu0 0.0
        %1063 = vmatpush.msra.mxu0 0.0
        %1064 = vmatpush.msra.mxu0 0.0
        %1065 = vmatpush.msra.mxu0 0.0
        %1066 = vmatpush.msra.mxu0 0.0
        %1067 = vmatpush.msra.mxu0 %v1047
        %1068 = vmatmul.f32.gmra.mxu0 %v1050
        %v1069 = vpop.f32.mrf.mxu0
        %v1070 = vadd.f32 0.0, %v1069
        %1071 = vdwg.mxu0
        %1073 = vrot.lane.b32.xlu0 %v910, 8
        %v1074 = vpop.permute.xlu0 %1073
        %1077 = vrot.lane.b32.xlu0 %v990, 16
        %v1078 = vpop.permute.xlu0 %1077
        %1081 = vrot.lane.b32.xlu0 %v1070, 24
        %v1082 = vpop.permute.xlu0 %1081
        %v1084 = vsel %vm752, %v830, %v1074
        %v1085 = vsel %vm707, %v1084, %v1078
        %vm1086 = vcmask 195584
        %v1087 = vsel %vm1086, %v1085, %v1082
        %v1088 = vpack.c.bf16 %v1087, %v1087
        %v1089 = vld [vmem:[#allocation10] sm:$0xf]
        %v1090 = vld [vmem:[#allocation10 + $0x4] sm:$0xf]
        %v1091 = vld [vmem:[#allocation10 + $0x8] sm:$0xf]
        %v1092 = vld [vmem:[#allocation10 + $0xc] sm:$0xf]
        %v1093 = vld [vmem:[%s7] sm:$0x1]
        %v1095 = vperm.slane %v1093, 0
        %v1101 = vunpack.c.l.b16 %v1089
        %v1102 = vunpack.c.l.b16 %v1090
        %v1103 = vunpack.c.l.b16 %v1091
        %v1104 = vunpack.c.l.b16 %v1092
        %v1105 = vpack.c.b16 %v1102, %v1101
        %v1106 = vpack.c.b16 %v1104, %v1103
        %v1110 = vsel %vm732, %v1088, 0
        %1112 = vmatpush.bf16.msra.mxu0 0
        %1113 = vmatpush.bf16.msra.mxu0 0
        %1114 = vmatpush.bf16.msra.mxu0 0
        %1115 = vmatpush.bf16.msra.mxu0 0
        %1116 = vmatpush.bf16.msra.mxu0 0
        %1117 = vmatpush.bf16.msra.mxu0 0
        %1118 = vmatpush.bf16.msra.mxu0 %v1106
        %1119 = vmatpush.bf16.msra.mxu0 %v1105
        %1120 = vmatmul.bf16.gmra.mxu0 %v1110
        %v1121 = vpop.f32.mrf.mxu0
        %v1122 = vadd.f32 %v1095, %v1121
        %v1123 = vpop.f32.mrf.mxu0
        %1124 = vdwg.mxu0
        %v1125 = vadd.f32 %v1122, %v708
        %v1126 = vld [vmem:[#allocation11] sm:$0x1]
        %v1127 = vld [vmem:[%s9] sm:$0x1]
        %v1128 = vsel %vm732, %v1125, 0.0
        %1129 = vadd.xlane.f32.xlu0 %v1128
        %v1130 = vpop.xlane.xlu0 %1129
        %v1131 = vrcp.pop 32.0
        %v1132 = vmul.f32 32.0, %v1131
        %v1133 = vsub.f32 1.0, %v1132
        %v1134 = vmul.f32 %v1131, %v1133
        %v1135 = vadd.f32 %v1131, %v1134
        %vm1136 = vweird.f32 %v1131
        %v1137 = vsel %vm1136, %v1131, %v1135
        %v1138 = vmul.f32 %v1130, %v1137
        %v1139 = vsub.f32 %v1125, %v1138
        %v1140 = vmul.f32 %v1139, %v1139
        %v1141 = vsel %vm732, %v1140, 0.0
        %1142 = vadd.xlane.f32.xlu0 %v1141
        %v1143 = vpop.xlane.xlu0 %1142
        %v1144 = vmul.f32 %v1143, %v1137
        %v1145 = vadd.f32 %v1144, 1e-05
        %v1146 = vrsqrt.pop %v1145
        %v1147 = vmul.f32 %v1146, %v1145
        %v1148 = vmul.f32 %v1147, %v1146
        %v1149 = vmul.f32 0.5, %v1148
        %v1150 = vsub.f32 1.5, %v1149
        %v1151 = vmul.f32 %v1146, %v1150
        %vm1152 = vweird.f32 %v1145
        %vm1153 = vweird.f32 %v1146
        %vm1154 = vmor %vm1152, %vm1153
        %v1155 = vsel %vm1154, %v1146, %v1151
        %v1156 = vmul.f32 %v1139, %v1155
        %v1158 = vperm.slane %v1126, 0
        %v1160 = vmul.f32 %v1156, %v1158
        %v1162 = vperm.slane %v1127, 0
        %v1164 = vadd.f32 %v1160, %v1162
        %v1165 = vpack.c.bf16 %v1164, %v1164
        %v1166 = vld [vmem:[#allocation13] sm:$0xf]
        %v1167 = vld [vmem:[#allocation13 + $0x4] sm:$0xf]
        %v1168 = vld [vmem:[#allocation13 + $0x8] sm:$0xf]
        %v1169 = vld [vmem:[#allocation13 + $0xc] sm:$0xf]
        %v1170 = vld [vmem:[%s11] sm:$0x1]
        %v1172 = vperm.slane %v1170, 0
        %v1178 = vunpack.c.l.b16 %v1166
        %v1179 = vunpack.c.l.b16 %v1167
        %v1180 = vunpack.c.l.b16 %v1168
        %v1181 = vunpack.c.l.b16 %v1169
        %v1182 = vpack.c.b16 %v1179, %v1178
        %v1183 = vpack.c.b16 %v1181, %v1180
        %v1187 = vsel %vm732, %v1165, 0
        %1189 = vmatpush.bf16.msra.mxu0 0
        %1190 = vmatpush.bf16.msra.mxu0 0
        %1191 = vmatpush.bf16.msra.mxu0 0
        %1192 = vmatpush.bf16.msra.mxu0 0
        %1193 = vmatpush.bf16.msra.mxu0 0
        %1194 = vmatpush.bf16.msra.mxu0 0
        %1195 = vmatpush.bf16.msra.mxu0 %v1183
        %1196 = vmatpush.bf16.msra.mxu0 %v1182
        %1197 = vmatmul.bf16.gmra.mxu0 %v1187
        %v1198 = vpop.f32.mrf.mxu0
        %v1199 = vadd.f32 %v1172, %v1198
        %v1200 = vpop.f32.mrf.mxu0
        %1201 = vdwg.mxu0
        %v1202 = vmax.f32 %v1199, 0.0
        %v1203 = vpack.c.bf16 %v1202, %v1202
        %v1204 = vld [vmem:[#allocation14] sm:$0xf]
        %v1205 = vld [vmem:[#allocation14 + $0x4] sm:$0xf]
        %v1206 = vld [vmem:[#allocation14 + $0x8] sm:$0xf]
        %v1207 = vld [vmem:[#allocation14 + $0xc] sm:$0xf]
        %v1208 = vld [vmem:[%s13] sm:$0x1]
        %v1210 = vperm.slane %v1208, 0
        %v1216 = vunpack.c.l.b16 %v1204
        %v1217 = vunpack.c.l.b16 %v1205
        %v1218 = vunpack.c.l.b16 %v1206
        %v1219 = vunpack.c.l.b16 %v1207
        %v1220 = vpack.c.b16 %v1217, %v1216
        %v1221 = vpack.c.b16 %v1219, %v1218
        %v1225 = vsel %vm732, %v1203, 0
        %1227 = vmatpush.bf16.msra.mxu0 0
        %1228 = vmatpush.bf16.msra.mxu0 0
        %1229 = vmatpush.bf16.msra.mxu0 0
        %1230 = vmatpush.bf16.msra.mxu0 0
        %1231 = vmatpush.bf16.msra.mxu0 0
        %1232 = vmatpush.bf16.msra.mxu0 0
        %1233 = vmatpush.bf16.msra.mxu0 %v1221
        %1234 = vmatpush.bf16.msra.mxu0 %v1220
        %1235 = vmatmul.bf16.gmra.mxu0 %v1225
        %v1236 = vpop.f32.mrf.mxu0
        %v1237 = vadd.f32 %v1210, %v1236
        %v1238 = vpop.f32.mrf.mxu0
        %1239 = vdwg.mxu0
        %v1240 = vadd.f32 %v1164, %v1237
        %v1241 = vld [vmem:[#allocation16] sm:$0x1]
        %v1242 = vld [vmem:[%s15] sm:$0x1]
        %v1243 = vsel %vm732, %v1240, 0.0
        %1244 = vadd.xlane.f32.xlu0 %v1243
        %v1245 = vpop.xlane.xlu0 %1244
        %v1246 = vmul.f32 %v1245, %v1137
        %v1247 = vsub.f32 %v1240, %v1246
        %v1248 = vmul.f32 %v1247, %v1247
        %v1249 = vsel %vm732, %v1248, 0.0
        %1250 = vadd.xlane.f32.xlu0 %v1249
        %v1251 = vpop.xlane.xlu0 %1250
        %v1252 = vmul.f32 %v1251, %v1137
        %v1253 = vadd.f32 %v1252, 1e-05
        %v1254 = vrsqrt.pop %v1253
        %v1255 = vmul.f32 %v1254, %v1253
        %v1256 = vmul.f32 %v1255, %v1254
        %v1257 = vmul.f32 0.5, %v1256
        %v1258 = vsub.f32 1.5, %v1257
        %v1259 = vmul.f32 %v1254, %v1258
        %vm1260 = vweird.f32 %v1253
        %vm1261 = vweird.f32 %v1254
        %vm1262 = vmor %vm1260, %vm1261
        %v1263 = vsel %vm1262, %v1254, %v1259
        %v1264 = vmul.f32 %v1247, %v1263
        %v1266 = vperm.slane %v1241, 0
        %v1268 = vmul.f32 %v1264, %v1266
        %v1270 = vperm.slane %v1242, 0
        %v1272 = vadd.f32 %v1268, %v1270
        %v1273 = vpack.c.bf16 %v1272, %v1272
        %s1274 = scalar_lea.vmem [#allocation8], 16
        %v1275 = vld [vmem:[%s1274] sm:$0xf]
        %v1276 = vld [vmem:[%s1274 + $0x4] sm:$0xf]
        %v1277 = vld [vmem:[%s1274 + $0x8] sm:$0xf]
        %v1278 = vld [vmem:[%s1274 + $0xc] sm:$0xf]
        %s1279 = scalar_lea.vmem %s5, 1
        %v1280 = vld [vmem:[%s1279] sm:$0x1]
        %v1282 = vperm.slane %v1280, 0
        %v1288 = vunpack.c.l.b16 %v1275
        %v1289 = vunpack.c.l.b16 %v1276
        %v1290 = vunpack.c.l.b16 %v1277
        %v1291 = vunpack.c.l.b16 %v1278
        %v1292 = vpack.c.b16 %v1289, %v1288
        %v1293 = vpack.c.b16 %v1291, %v1290
        %v1297 = vsel %vm732, %v1273, 0
        %1299 = vmatpush.bf16.msra.mxu0 0
        %1300 = vmatpush.bf16.msra.mxu0 0
        %1301 = vmatpush.bf16.msra.mxu0 0
        %1302 = vmatpush.bf16.msra.mxu0 0
        %1303 = vmatpush.bf16.msra.mxu0 0
        %1304 = vmatpush.bf16.msra.mxu0 0
        %1305 = vmatpush.bf16.msra.mxu0 %v1293
        %1306 = vmatpush.bf16.msra.mxu0 %v1292
        %1307 = vmatmul.bf16.gmra.mxu0 %v1297
        %v1308 = vpop.f32.mrf.mxu0
        %v1309 = vadd.f32 %v1282, %v1308
        %v1310 = vpop.f32.mrf.mxu0
        %1311 = vdwg.mxu0
        %1313 = vrot.lane.b32.xlu0 %v1309, 96
        %v1314 = vpop.permute.xlu0 %1313
        %v1315 = vsel %vm752, %v1309, 0
        %v1317 = vsel %vm752, %v1314, 0
        %1319 = vmatpush.xpose.msra.mxu0 0.0
        %1320 = vmatpush.xpose.msra.mxu0 0.0
        %1321 = vmatpush.xpose.msra.mxu0 0.0
        %1322 = vmatpush.xpose.msra.mxu0 0.0
        %1323 = vmatpush.xpose.msra.mxu0 0.0
        %1324 = vmatpush.xpose.msra.mxu0 0.0
        %1325 = vmatpush.xpose.msra.mxu0 0.0
        %1326 = vmatpush.xpose.msra.mxu0 0.0
        %1327 = vmatpush.xpose.msra.mxu0 0.0
        %1328 = vmatpush.xpose.msra.mxu0 0.0
        %1329 = vmatpush.xpose.msra.mxu0 0.0
        %1330 = vmatpush.xpose.msra.mxu0 0.0
        %1331 = vmatpush.xpose.msra.mxu0 0.0
        %1332 = vmatpush.xpose.msra.mxu0 0.0
        %1333 = vmatpush.xpose.msra.mxu0 0.0
        %1334 = vmatpush.xpose.msra.mxu0 %v1317
        %1335 = vmatmul.f32.gmra.mxu0 %v1315
        %v1336 = vpop.f32.mrf.mxu0
        %v1337 = vadd.f32 0.0, %v1336
        %1338 = vdwg.mxu0
        %v1339 = vmul.f32 %v1337, 0.35355338
        %v1340 = vsel %vm780, %v1339, -1e+09
        %v1341 = vsel %vm752, %v1340, -inf
        %1342 = vmax.xlane.f32.xlu0 %v1341
        %v1343 = vpop.xlane.xlu0 %1342
        %v1344 = vsub.f32 %v1340, %v1343
        %v1345 = vmul.f32 %v1344, 1.442695
        %v1346 = vpow.pop %v1345
        %v1347 = vsel %vm752, %v1346, 0.0
        %1348 = vadd.xlane.f32.xlu0 %v1347
        %v1349 = vpop.xlane.xlu0 %1348
        %v1350 = vrcp.pop %v1349
        %v1351 = vmul.f32 %v1349, %v1350
        %v1352 = vsub.f32 1.0, %v1351
        %v1353 = vmul.f32 %v1350, %v1352
        %v1354 = vadd.f32 %v1350, %v1353
        %vm1355 = vweird.f32 %v1349
        %vm1356 = vweird.f32 %v1350
        %vm1357 = vmor %vm1355, %vm1356
        %v1358 = vsel %vm1357, %v1350, %v1354
        %v1359 = vand.u32 2147483647, %v1349
        %vm1360 = vcmp.eq.f32.partialorder %v1359, 8.507059e+37
        %v1361 = vand.u32 %v1349, 2147483648
        %v1362 = vor.u32 1.1754944e-38, %v1361
        %v1363 = vsel %vm1360, %v1362, %v1358
        %v1364 = vmul.f32 %v1346, %v1363
        %1365 = vrot.lane.b32.xlu0 %v1309, 64
        %v1366 = vpop.permute.xlu0 %1365
        %v1369 = vsel %vm752, %v1364, 0
        %1371 = vmatpush.msra.mxu0 0.0
        %1372 = vmatpush.msra.mxu0 0.0
        %1373 = vmatpush.msra.mxu0 0.0
        %1374 = vmatpush.msra.mxu0 0.0
        %1375 = vmatpush.msra.mxu0 0.0
        %1376 = vmatpush.msra.mxu0 0.0
        %1377 = vmatpush.msra.mxu0 0.0
        %1378 = vmatpush.msra.mxu0 0.0
        %1379 = vmatpush.msra.mxu0 0.0
        %1380 = vmatpush.msra.mxu0 0.0
        %1381 = vmatpush.msra.mxu0 0.0
        %1382 = vmatpush.msra.mxu0 0.0
        %1383 = vmatpush.msra.mxu0 0.0
        %1384 = vmatpush.msra.mxu0 0.0
        %1385 = vmatpush.msra.mxu0 0.0
        %1386 = vmatpush.msra.mxu0 %v1366
        %1387 = vmatmul.f32.gmra.mxu0 %v1369
        %v1388 = vpop.f32.mrf.mxu0
        %v1389 = vadd.f32 0.0, %v1388
        %1390 = vdwg.mxu0
        %1391 = vrot.lane.b32.xlu0 %v1309, 120
        %v1392 = vpop.permute.xlu0 %1391
        %1393 = vrot.lane.b32.xlu0 %v1309, 88
        %v1394 = vpop.permute.xlu0 %1393
        %v1395 = vsel %vm752, %v1392, 0
        %v1397 = vsel %vm752, %v1394, 0
        %1399 = vmatpush.xpose.msra.mxu0 0.0
        %1400 = vmatpush.xpose.msra.mxu0 0.0
        %1401 = vmatpush.xpose.msra.mxu0 0.0
        %1402 = vmatpush.xpose.msra.mxu0 0.0
        %1403 = vmatpush.xpose.msra.mxu0 0.0
        %1404 = vmatpush.xpose.msra.mxu0 0.0
        %1405 = vmatpush.xpose.msra.mxu0 0.0
        %1406 = vmatpush.xpose.msra.mxu0 0.0
        %1407 = vmatpush.xpose.msra.mxu0 0.0
        %1408 = vmatpush.xpose.msra.mxu0 0.0
        %1409 = vmatpush.xpose.msra.mxu0 0.0
        %1410 = vmatpush.xpose.msra.mxu0 0.0
        %1411 = vmatpush.xpose.msra.mxu0 0.0
        %1412 = vmatpush.xpose.msra.mxu0 0.0
        %1413 = vmatpush.xpose.msra.mxu0 0.0
        %1414 = vmatpush.xpose.msra.mxu0 %v1397
        %1415 = vmatmul.f32.gmra.mxu0 %v1395
        %v1416 = vpop.f32.mrf.mxu0
        %v1417 = vadd.f32 0.0, %v1416
        %1418 = vdwg.mxu0
        %v1419 = vmul.f32 %v1417, 0.35355338
        %v1420 = vsel %vm780, %v1419, -1e+09
        %v1421 = vsel %vm752, %v1420, -inf
        %1422 = vmax.xlane.f32.xlu0 %v1421
        %v1423 = vpop.xlane.xlu0 %1422
        %v1424 = vsub.f32 %v1420, %v1423
        %v1425 = vmul.f32 %v1424, 1.442695
        %v1426 = vpow.pop %v1425
        %v1427 = vsel %vm752, %v1426, 0.0
        %1428 = vadd.xlane.f32.xlu0 %v1427
        %v1429 = vpop.xlane.xlu0 %1428
        %v1430 = vrcp.pop %v1429
        %v1431 = vmul.f32 %v1429, %v1430
        %v1432 = vsub.f32 1.0, %v1431
        %v1433 = vmul.f32 %v1430, %v1432
        %v1434 = vadd.f32 %v1430, %v1433
        %vm1435 = vweird.f32 %v1429
        %vm1436 = vweird.f32 %v1430
        %vm1437 = vmor %vm1435, %vm1436
        %v1438 = vsel %vm1437, %v1430, %v1434
        %v1439 = vand.u32 2147483647, %v1429
        %vm1440 = vcmp.eq.f32.partialorder %v1439, 8.507059e+37
        %v1441 = vand.u32 %v1429, 2147483648
        %v1442 = vor.u32 1.1754944e-38, %v1441
        %v1443 = vsel %vm1440, %v1442, %v1438
        %v1444 = vmul.f32 %v1426, %v1443
        %1445 = vrot.lane.b32.xlu0 %v1309, 56
        %v1446 = vpop.permute.xlu0 %1445
        %v1449 = vsel %vm752, %v1444, 0
        %1451 = vmatpush.msra.mxu0 0.0
        %1452 = vmatpush.msra.mxu0 0.0
        %1453 = vmatpush.msra.mxu0 0.0
        %1454 = vmatpush.msra.mxu0 0.0
        %1455 = vmatpush.msra.mxu0 0.0
        %1456 = vmatpush.msra.mxu0 0.0
        %1457 = vmatpush.msra.mxu0 0.0
        %1458 = vmatpush.msra.mxu0 0.0
        %1459 = vmatpush.msra.mxu0 0.0
        %1460 = vmatpush.msra.mxu0 0.0
        %1461 = vmatpush.msra.mxu0 0.0
        %1462 = vmatpush.msra.mxu0 0.0
        %1463 = vmatpush.msra.mxu0 0.0
        %1464 = vmatpush.msra.mxu0 0.0
        %1465 = vmatpush.msra.mxu0 0.0
        %1466 = vmatpush.msra.mxu0 %v1446
        %1467 = vmatmul.f32.gmra.mxu0 %v1449
        %v1468 = vpop.f32.mrf.mxu0
        %v1469 = vadd.f32 0.0, %v1468
        %1470 = vdwg.mxu0
        %1471 = vrot.lane.b32.xlu0 %v1309, 112
        %v1472 = vpop.permute.xlu0 %1471
        %1473 = vrot.lane.b32.xlu0 %v1309, 80
        %v1474 = vpop.permute.xlu0 %1473
        %v1475 = vsel %vm752, %v1472, 0
        %v1477 = vsel %vm752, %v1474, 0
        %1479 = vmatpush.xpose.msra.mxu0 0.0
        %1480 = vmatpush.xpose.msra.mxu0 0.0
        %1481 = vmatpush.xpose.msra.mxu0 0.0
        %1482 = vmatpush.xpose.msra.mxu0 0.0
        %1483 = vmatpush.xpose.msra.mxu0 0.0
        %1484 = vmatpush.xpose.msra.mxu0 0.0
        %1485 = vmatpush.xpose.msra.mxu0 0.0
        %1486 = vmatpush.xpose.msra.mxu0 0.0
        %1487 = vmatpush.xpose.msra.mxu0 0.0
        %1488 = vmatpush.xpose.msra.mxu0 0.0
        %1489 = vmatpush.xpose.msra.mxu0 0.0
        %1490 = vmatpush.xpose.msra.mxu0 0.0
        %1491 = vmatpush.xpose.msra.mxu0 0.0
        %1492 = vmatpush.xpose.msra.mxu0 0.0
        %1493 = vmatpush.xpose.msra.mxu0 0.0
        %1494 = vmatpush.xpose.msra.mxu0 %v1477
        %1495 = vmatmul.f32.gmra.mxu0 %v1475
        %v1496 = vpop.f32.mrf.mxu0
        %v1497 = vadd.f32 0.0, %v1496
        %1498 = vdwg.mxu0
        %v1499 = vmul.f32 %v1497, 0.35355338
        %v1500 = vsel %vm780, %v1499, -1e+09
        %v1501 = vsel %vm752, %v1500, -inf
        %1502 = vmax.xlane.f32.xlu0 %v1501
        %v1503 = vpop.xlane.xlu0 %1502
        %v1504 = vsub.f32 %v1500, %v1503
        %v1505 = vmul.f32 %v1504, 1.442695
        %v1506 = vpow.pop %v1505
        %v1507 = vsel %vm752, %v1506, 0.0
        %1508 = vadd.xlane.f32.xlu0 %v1507
        %v1509 = vpop.xlane.xlu0 %1508
        %v1510 = vrcp.pop %v1509
        %v1511 = vmul.f32 %v1509, %v1510
        %v1512 = vsub.f32 1.0, %v1511
        %v1513 = vmul.f32 %v1510, %v1512
        %v1514 = vadd.f32 %v1510, %v1513
        %vm1515 = vweird.f32 %v1509
        %vm1516 = vweird.f32 %v1510
        %vm1517 = vmor %vm1515, %vm1516
        %v1518 = vsel %vm1517, %v1510, %v1514
        %v1519 = vand.u32 2147483647, %v1509
        %vm1520 = vcmp.eq.f32.partialorder %v1519, 8.507059e+37
        %v1521 = vand.u32 %v1509, 2147483648
        %v1522 = vor.u32 1.1754944e-38, %v1521
        %v1523 = vsel %vm1520, %v1522, %v1518
        %v1524 = vmul.f32 %v1506, %v1523
        %1525 = vrot.lane.b32.xlu0 %v1309, 48
        %v1526 = vpop.permute.xlu0 %1525
        %v1529 = vsel %vm752, %v1524, 0
        %1531 = vmatpush.msra.mxu0 0.0
        %1532 = vmatpush.msra.mxu0 0.0
        %1533 = vmatpush.msra.mxu0 0.0
        %1534 = vmatpush.msra.mxu0 0.0
        %1535 = vmatpush.msra.mxu0 0.0
        %1536 = vmatpush.msra.mxu0 0.0
        %1537 = vmatpush.msra.mxu0 0.0
        %1538 = vmatpush.msra.mxu0 0.0
        %1539 = vmatpush.msra.mxu0 0.0
        %1540 = vmatpush.msra.mxu0 0.0
        %1541 = vmatpush.msra.mxu0 0.0
        %1542 = vmatpush.msra.mxu0 0.0
        %1543 = vmatpush.msra.mxu0 0.0
        %1544 = vmatpush.msra.mxu0 0.0
        %1545 = vmatpush.msra.mxu0 0.0
        %1546 = vmatpush.msra.mxu0 %v1526
        %1547 = vmatmul.f32.gmra.mxu0 %v1529
        %v1548 = vpop.f32.mrf.mxu0
        %v1549 = vadd.f32 0.0, %v1548
        %1550 = vdwg.mxu0
        %1551 = vrot.lane.b32.xlu0 %v1309, 104
        %v1552 = vpop.permute.xlu0 %1551
        %1553 = vrot.lane.b32.xlu0 %v1309, 72
        %v1554 = vpop.permute.xlu0 %1553
        %v1555 = vsel %vm752, %v1552, 0
        %v1557 = vsel %vm752, %v1554, 0
        %1559 = vmatpush.xpose.msra.mxu0 0.0
        %1560 = vmatpush.xpose.msra.mxu0 0.0
        %1561 = vmatpush.xpose.msra.mxu0 0.0
        %1562 = vmatpush.xpose.msra.mxu0 0.0
        %1563 = vmatpush.xpose.msra.mxu0 0.0
        %1564 = vmatpush.xpose.msra.mxu0 0.0
        %1565 = vmatpush.xpose.msra.mxu0 0.0
        %1566 = vmatpush.xpose.msra.mxu0 0.0
        %1567 = vmatpush.xpose.msra.mxu0 0.0
        %1568 = vmatpush.xpose.msra.mxu0 0.0
        %1569 = vmatpush.xpose.msra.mxu0 0.0
        %1570 = vmatpush.xpose.msra.mxu0 0.0
        %1571 = vmatpush.xpose.msra.mxu0 0.0
        %1572 = vmatpush.xpose.msra.mxu0 0.0
        %1573 = vmatpush.xpose.msra.mxu0 0.0
        %1574 = vmatpush.xpose.msra.mxu0 %v1557
        %1575 = vmatmul.f32.gmra.mxu0 %v1555
        %v1576 = vpop.f32.mrf.mxu0
        %v1577 = vadd.f32 0.0, %v1576
        %1578 = vdwg.mxu0
        %v1579 = vmul.f32 %v1577, 0.35355338
        %v1580 = vsel %vm780, %v1579, -1e+09
        %v1581 = vsel %vm752, %v1580, -inf
        %1582 = vmax.xlane.f32.xlu0 %v1581
        %v1583 = vpop.xlane.xlu0 %1582
        %v1584 = vsub.f32 %v1580, %v1583
        %v1585 = vmul.f32 %v1584, 1.442695
        %v1586 = vpow.pop %v1585
        %v1587 = vsel %vm752, %v1586, 0.0
        %1588 = vadd.xlane.f32.xlu0 %v1587
        %v1589 = vpop.xlane.xlu0 %1588
        %v1590 = vrcp.pop %v1589
        %v1591 = vmul.f32 %v1589, %v1590
        %v1592 = vsub.f32 1.0, %v1591
        %v1593 = vmul.f32 %v1590, %v1592
        %v1594 = vadd.f32 %v1590, %v1593
        %vm1595 = vweird.f32 %v1589
        %vm1596 = vweird.f32 %v1590
        %vm1597 = vmor %vm1595, %vm1596
        %v1598 = vsel %vm1597, %v1590, %v1594
        %v1599 = vand.u32 2147483647, %v1589
        %vm1600 = vcmp.eq.f32.partialorder %v1599, 8.507059e+37
        %v1601 = vand.u32 %v1589, 2147483648
        %v1602 = vor.u32 1.1754944e-38, %v1601
        %v1603 = vsel %vm1600, %v1602, %v1598
        %v1604 = vmul.f32 %v1586, %v1603
        %1605 = vrot.lane.b32.xlu0 %v1309, 40
        %v1606 = vpop.permute.xlu0 %1605
        %v1609 = vsel %vm752, %v1604, 0
        %1611 = vmatpush.msra.mxu0 0.0
        %1612 = vmatpush.msra.mxu0 0.0
        %1613 = vmatpush.msra.mxu0 0.0
        %1614 = vmatpush.msra.mxu0 0.0
        %1615 = vmatpush.msra.mxu0 0.0
        %1616 = vmatpush.msra.mxu0 0.0
        %1617 = vmatpush.msra.mxu0 0.0
        %1618 = vmatpush.msra.mxu0 0.0
        %1619 = vmatpush.msra.mxu0 0.0
        %1620 = vmatpush.msra.mxu0 0.0
        %1621 = vmatpush.msra.mxu0 0.0
        %1622 = vmatpush.msra.mxu0 0.0
        %1623 = vmatpush.msra.mxu0 0.0
        %1624 = vmatpush.msra.mxu0 0.0
        %1625 = vmatpush.msra.mxu0 0.0
        %1626 = vmatpush.msra.mxu0 %v1606
        %1627 = vmatmul.f32.gmra.mxu0 %v1609
        %v1628 = vpop.f32.mrf.mxu0
        %v1629 = vadd.f32 0.0, %v1628
        %1630 = vdwg.mxu0
        %1632 = vrot.lane.b32.xlu0 %v1469, 8
        %v1633 = vpop.permute.xlu0 %1632
        %1636 = vrot.lane.b32.xlu0 %v1549, 16
        %v1637 = vpop.permute.xlu0 %1636
        %1640 = vrot.lane.b32.xlu0 %v1629, 24
        %v1641 = vpop.permute.xlu0 %1640
        %v1643 = vsel %vm752, %v1389, %v1633
        %v1644 = vsel %vm707, %v1643, %v1637
        %v1645 = vsel %vm1086, %v1644, %v1641
        %v1646 = vpack.c.bf16 %v1645, %v1645
        %s1647 = scalar_lea.vmem [#allocation10], 16
        %v1648 = vld [vmem:[%s1647] sm:$0xf]
        %v1649 = vld [vmem:[%s1647 + $0x4] sm:$0xf]
        %v1650 = vld [vmem:[%s1647 + $0x8] sm:$0xf]
        %v1651 = vld [vmem:[%s1647 + $0xc] sm:$0xf]
        %s1652 = scalar_lea.vmem %s7, 1
        %v1653 = vld [vmem:[%s1652] sm:$0x1]
        %v1655 = vperm.slane %v1653, 0
        %v1661 = vunpack.c.l.b16 %v1648
        %v1662 = vunpack.c.l.b16 %v1649
        %v1663 = vunpack.c.l.b16 %v1650
        %v1664 = vunpack.c.l.b16 %v1651
        %v1665 = vpack.c.b16 %v1662, %v1661
        %v1666 = vpack.c.b16 %v1664, %v1663
        %v1670 = vsel %vm732, %v1646, 0
        %1672 = vmatpush.bf16.msra.mxu0 0
        %1673 = vmatpush.bf16.msra.mxu0 0
        %1674 = vmatpush.bf16.msra.mxu0 0
        %1675 = vmatpush.bf16.msra.mxu0 0
        %1676 = vmatpush.bf16.msra.mxu0 0
        %1677 = vmatpush.bf16.msra.mxu0 0
        %1678 = vmatpush.bf16.msra.mxu0 %v1666
        %1679 = vmatpush.bf16.msra.mxu0 %v1665
        %1680 = vmatmul.bf16.gmra.mxu0 %v1670
        %v1681 = vpop.f32.mrf.mxu0
        %v1682 = vadd.f32 %v1655, %v1681
        %v1683 = vpop.f32.mrf.mxu0
        %1684 = vdwg.mxu0
        %v1685 = vadd.f32 %v1682, %v1272
        %s1686 = scalar_lea.vmem [#allocation11], 1
        %v1687 = vld [vmem:[%s1686] sm:$0x1]
        %s1688 = scalar_lea.vmem %s9, 1
        %v1689 = vld [vmem:[%s1688] sm:$0x1]
        %v1690 = vsel %vm732, %v1685, 0.0
        %1691 = vadd.xlane.f32.xlu0 %v1690
        %v1692 = vpop.xlane.xlu0 %1691
        %v1693 = vmul.f32 %v1692, %v1137
        %v1694 = vsub.f32 %v1685, %v1693
        %v1695 = vmul.f32 %v1694, %v1694
        %v1696 = vsel %vm732, %v1695, 0.0
        %1697 = vadd.xlane.f32.xlu0 %v1696
        %v1698 = vpop.xlane.xlu0 %1697
        %v1699 = vmul.f32 %v1698, %v1137
        %v1700 = vadd.f32 %v1699, 1e-05
        %v1701 = vrsqrt.pop %v1700
        %v1702 = vmul.f32 %v1701, %v1700
        %v1703 = vmul.f32 %v1702, %v1701
        %v1704 = vmul.f32 0.5, %v1703
        %v1705 = vsub.f32 1.5, %v1704
        %v1706 = vmul.f32 %v1701, %v1705
        %vm1707 = vweird.f32 %v1700
        %vm1708 = vweird.f32 %v1701
        %vm1709 = vmor %vm1707, %vm1708
        %v1710 = vsel %vm1709, %v1701, %v1706
        %v1711 = vmul.f32 %v1694, %v1710
        %v1713 = vperm.slane %v1687, 0
        %v1715 = vmul.f32 %v1711, %v1713
        %v1717 = vperm.slane %v1689, 0
        %v1719 = vadd.f32 %v1715, %v1717
        %v1720 = vpack.c.bf16 %v1719, %v1719
        %s1721 = scalar_lea.vmem [#allocation13], 16
        %v1722 = vld [vmem:[%s1721] sm:$0xf]
        %v1723 = vld [vmem:[%s1721 + $0x4] sm:$0xf]
        %v1724 = vld [vmem:[%s1721 + $0x8] sm:$0xf]
        %v1725 = vld [vmem:[%s1721 + $0xc] sm:$0xf]
        %s1726 = scalar_lea.vmem %s11, 1
        %v1727 = vld [vmem:[%s1726] sm:$0x1]
        %v1729 = vperm.slane %v1727, 0
        %v1735 = vunpack.c.l.b16 %v1722
        %v1736 = vunpack.c.l.b16 %v1723
        %v1737 = vunpack.c.l.b16 %v1724
        %v1738 = vunpack.c.l.b16 %v1725
        %v1739 = vpack.c.b16 %v1736, %v1735
        %v1740 = vpack.c.b16 %v1738, %v1737
        %v1744 = vsel %vm732, %v1720, 0
        %1746 = vmatpush.bf16.msra.mxu0 0
        %1747 = vmatpush.bf16.msra.mxu0 0
        %1748 = vmatpush.bf16.msra.mxu0 0
        %1749 = vmatpush.bf16.msra.mxu0 0
        %1750 = vmatpush.bf16.msra.mxu0 0
        %1751 = vmatpush.bf16.msra.mxu0 0
        %1752 = vmatpush.bf16.msra.mxu0 %v1740
        %1753 = vmatpush.bf16.msra.mxu0 %v1739
        %1754 = vmatmul.bf16.gmra.mxu0 %v1744
        %v1755 = vpop.f32.mrf.mxu0
        %v1756 = vadd.f32 %v1729, %v1755
        %v1757 = vpop.f32.mrf.mxu0
        %1758 = vdwg.mxu0
        %v1759 = vmax.f32 %v1756, 0.0
        %v1760 = vpack.c.bf16 %v1759, %v1759
        %s1761 = scalar_lea.vmem [#allocation14], 16
        %v1762 = vld [vmem:[%s1761] sm:$0xf]
        %v1763 = vld [vmem:[%s1761 + $0x4] sm:$0xf]
        %v1764 = vld [vmem:[%s1761 + $0x8] sm:$0xf]
        %v1765 = vld [vmem:[%s1761 + $0xc] sm:$0xf]
        %s1766 = scalar_lea.vmem %s13, 1
        %v1767 = vld [vmem:[%s1766] sm:$0x1]
        %v1769 = vperm.slane %v1767, 0
        %v1775 = vunpack.c.l.b16 %v1762
        %v1776 = vunpack.c.l.b16 %v1763
        %v1777 = vunpack.c.l.b16 %v1764
        %v1778 = vunpack.c.l.b16 %v1765
        %v1779 = vpack.c.b16 %v1776, %v1775
        %v1780 = vpack.c.b16 %v1778, %v1777
        %v1784 = vsel %vm732, %v1760, 0
        %1786 = vmatpush.bf16.msra.mxu0 0
        %1787 = vmatpush.bf16.msra.mxu0 0
        %1788 = vmatpush.bf16.msra.mxu0 0
        %1789 = vmatpush.bf16.msra.mxu0 0
        %1790 = vmatpush.bf16.msra.mxu0 0
        %1791 = vmatpush.bf16.msra.mxu0 0
        %1792 = vmatpush.bf16.msra.mxu0 %v1780
        %1793 = vmatpush.bf16.msra.mxu0 %v1779
        %1794 = vmatmul.bf16.gmra.mxu0 %v1784
        %v1795 = vpop.f32.mrf.mxu0
        %v1796 = vadd.f32 %v1769, %v1795
        %v1797 = vpop.f32.mrf.mxu0
        %1798 = vdwg.mxu0
        %v1799 = vadd.f32 %v1719, %v1796
        %s1800 = scalar_lea.vmem [#allocation16], 1
        %v1801 = vld [vmem:[%s1800] sm:$0x1]
        %s1802 = scalar_lea.vmem %s15, 1
        %v1803 = vld [vmem:[%s1802] sm:$0x1]
        %v1804 = vsel %vm732, %v1799, 0.0
        %1805 = vadd.xlane.f32.xlu0 %v1804
        %v1806 = vpop.xlane.xlu0 %1805
        %v1807 = vmul.f32 %v1806, %v1137
        %v1808 = vsub.f32 %v1799, %v1807
        %v1809 = vmul.f32 %v1808, %v1808
        %v1810 = vsel %vm732, %v1809, 0.0
        %1811 = vadd.xlane.f32.xlu0 %v1810
        %v1812 = vpop.xlane.xlu0 %1811
        %v1813 = vmul.f32 %v1812, %v1137
        %v1814 = vadd.f32 %v1813, 1e-05
        %v1815 = vrsqrt.pop %v1814
        %v1816 = vmul.f32 %v1815, %v1814
        %v1817 = vmul.f32 %v1816, %v1815
        %v1818 = vmul.f32 0.5, %v1817
        %v1819 = vsub.f32 1.5, %v1818
        %v1820 = vmul.f32 %v1815, %v1819
        %vm1821 = vweird.f32 %v1814
        %vm1822 = vweird.f32 %v1815
        %vm1823 = vmor %vm1821, %vm1822
        %v1824 = vsel %vm1823, %v1815, %v1820
        %v1825 = vmul.f32 %v1808, %v1824
        %v1827 = vperm.slane %v1801, 0
        %v1829 = vmul.f32 %v1825, %v1827
        %v1831 = vperm.slane %v1803, 0
        %v1833 = vadd.f32 %v1829, %v1831
        %1834 = vst.msk [vmem:[%s677] sm:$0xff] %vm732, %v1833
        %s1835 = sand.u32 %s391, 1
        %s1836 = scalar_lea.sflag [#allocation4], %s1835
        %s1837 = sand.u32 %s391, 1
        %s1838 = smul.addr %s1837, 8
        %s1839 = scalar_lea.vmem [#allocation17], %s1838
        // Predicated region
        $region121: #{tpu_custom_call.1} parent=83 // pred_check
          %p1840 = pneg %p401
        $region122: #{tpu_custom_call.1} parent=83 // pred_check_branch
          %1842 = sbr.rel (%p1840) target = $region124
        $region123: #{tpu_custom_call.1} parent=83 // pred_region
          %1844 = vsyncadd %s1836, 0
          %s1845 = smul.addr %s37, 8
          %s1846 = scalar_lea.hbm %s16, %s1845
          %s1848 = sshll.u32 %s1839, 4
          %s1849 = int_to_ptr.vmem [resolvable:$true] %s1848
          %s1850 = sshll.u32 %s1846, 4
          %s1851 = int_to_ptr.hbm [resolvable:$true] %s1850
          %1853 = dma.vmem_to_hbm [thread:$0]  %s1849, 128, %s1851, %s1836
        $region124: #{tpu_custom_call.1} parent=83 // pred_fallthru
          _
      $region84: #{tpu_custom_call.1} parent=5 // pred_fallthru
        _
      %p1854 = scmp.le.s32.totalorder 2, %s32
      // Predicated region
      $region125: #{tpu_custom_call.1} parent=5 // pred_check
        %p1855 = pneg %p1854
      $region126: #{tpu_custom_call.1} parent=5 // pred_check_branch
        %1857 = sbr.rel (%p1855) target = $region128
      $region127: #{tpu_custom_call.1} parent=5 // pred_region
        %s1858 = ssub.s32 %s32, 2
        // Predicated region
        $region129: #{tpu_custom_call.1} parent=127 // pred_check
          %p1859 = pneg %p407
        $region130: #{tpu_custom_call.1} parent=127 // pred_check_branch
          %1861 = sbr.rel (%p1859) target = $region132
        $region131: #{tpu_custom_call.1} parent=127 // pred_region
          %s1862 = sand.u32 %s392, 1
          %s1863 = scalar_lea.sflag [#allocation4], %s1862
          %s1864 = sand.u32 %s392, 1
          %s1865 = smul.addr %s1864, 8
          %s1866 = scalar_lea.vmem [#allocation17], %s1865
          %1868 = dma.done %s1863, 128
        $region132: #{tpu_custom_call.1} parent=127 // pred_fallthru
          _
      $region128: #{tpu_custom_call.1} parent=5 // pred_fallthru
        _
    $region6: #{tpu_custom_call.1} parent=1 // loop_footer
      %s36 = sadd.s32 1, %s32
    $region7: #{tpu_custom_call.1} parent=1 // loop_footer_branch
      %31 = sbr.rel target = $region3
    $region8: #{tpu_custom_call.1} parent=1 // loop_exit
      _
    %1869 = vsyncpa [#allocation3], 1
    %s1870 = scalar_lea.sflag [#allocation3], 1
    %1871 = vsyncpa %s1870, 1
    %1872 = vsyncpa [#allocation6], 1
    %1873 = vsyncpa [#allocation9], 1
    %1874 = vsyncpa [#allocation12], 1
    %1875 = vsyncpa [#allocation15], 1
    %1876 = vsyncpa [#allocation4], 1
    %s1877 = scalar_lea.sflag [#allocation4], 1
    %1878 = vsyncpa %s1877, 1

</llo_original>
